<compile_context>
chip_gen: v5e
topology: v5e:2x2
jax: 0.10.0
libtpu: 0.0.40
codegen_flags: <defaults>
</compile_context>

<pallas_src>
import functools

import jax
import jax.numpy as jnp
from jax import lax
from jax.experimental import pallas as pl
from jax.experimental.pallas import tpu as pltpu

LANE = 128  # lane-dense slab / output width

# vec-slab row layout (per conv layer l: base = 6*l) --------------------------
VEC_ROWS_PER_CONV = 6            # bqkvs | we | wb_a | wb_b | ln_gamma | ln_beta
VEC_BM = 3 * VEC_ROWS_PER_CONV   # 18 : GTN output-mlp bias
VEC_B1 = VEC_BM + 1              # 19 : pair-MLP first bias
VEC_PLNG = VEC_BM + 2            # 20 : pair-MLP LayerNorm gamma
VEC_PLNB = VEC_BM + 3            # 21 : pair-MLP LayerNorm beta
VEC_B2 = VEC_BM + 4              # 22 : pair-MLP second bias
VEC_WH = VEC_BM + 5              # 23 : head weight (as a row)
VEC_BH = VEC_BM + 6              # 24 : head bias (lane 0)
VEC_TOTAL = VEC_BM + 7           # 25


# -----------------------------------------------------------------------------
# Fused kernel
# -----------------------------------------------------------------------------
def _gttp_fused_kernel(
    x_ref,                       # [N, Din]   node features (VMEM)
    ei_ref,                      # [2E]       int32 SMEM  (src..., dst...)
    eattr_ref,                   # [E]        f32   SMEM  edge scalars
    qidx_ref,                    # [4B]       int32 SMEM  (start..., end..., x1..., x2...)
    w128_ref,                    # [R, 128]   wqkvs x3 | wm | w2
    w512_ref,                    # [R, 4H]    split/stacked pair-MLP W1
    vec_ref,                     # [R, 128]   all bias / LN / 1-row vectors
    out_ref,                     # [B_pad, 128]
    *, din, c, n, e, b, b_pad, mlp_out, hidden, eps=1e-5):

  # ---- graph densification on the VPU (edge list lives in SMEM) -------------
  row_ids = lax.broadcasted_iota(jnp.int32, (n, n), 0)   # destination index
  col_ids = lax.broadcasted_iota(jnp.int32, (n, n), 1)   # source index
  mask = jnp.zeros((n, n), jnp.float32)
  ea = jnp.zeros((n, n), jnp.float32)
  for idx in range(e):                                   # E is small & static
    s = ei_ref[idx]                                      # src node
    d = ei_ref[e + idx]                                  # dst node
    cell = (row_ids == d) & (col_ids == s)
    mask = jnp.where(cell, 1.0, mask)
    ea = jnp.where(cell, eattr_ref[idx], ea)
  # loop-invariant additive mask bias (hoisted out of the 3 conv layers)
  neg_bias = (mask - 1.0) * 1e30

  # ---- TransformerConv (heads=1, edge_dim=1, beta=True) ---------------------
  def conv_layer(h, w_row0, vec_base, apply_post):
    w = w128_ref[w_row0:w_row0 + h.shape[1], :]          # fused [Din, 4C] Q|K|V|skip
    bqkvs = vec_ref[vec_base + 0:vec_base + 1, :]        # [1, 4C]
    we = vec_ref[vec_base + 1:vec_base + 2, 0:c]         # lin_edge weight [1, C]
    wb_a = vec_ref[vec_base + 2:vec_base + 3, 0:c]       # lin_beta rows, pre-combined
    wb_b = vec_ref[vec_base + 3:vec_base + 4, 0:c]

    proj = jnp.dot(h, w, preferred_element_type=jnp.float32) + bqkvs   # [N, 4C]
    q = proj[:, 0 * c:1 * c]        # 1/sqrt(C) already folded into wq/bq
    k = proj[:, 1 * c:2 * c]
    v = proj[:, 2 * c:3 * c]
    x_r = proj[:, 3 * c:4 * c]

    # scores[i, j] = q_i . (k_j + ea_ij * we)
    qk = lax.dot_general(q, k, (((1,), (1,)), ((), ())),
                         preferred_element_type=jnp.float32)           # [N, N]
    qwe = jnp.sum(q * we, axis=-1, keepdims=True)                      # [N, 1]
    scores = qk + ea * qwe

    masked = scores + neg_bias
    m = jnp.max(masked, axis=-1, keepdims=True)
    p = jnp.exp(masked - m) * mask
    denom = jnp.sum(p, axis=-1, keepdims=True)
    inv = pl.reciprocal(jnp.where(denom > 0, denom, 1.0), approx=False)
    alpha = p * inv                                      # rows with no edges -> all 0

    # out_i = sum_j alpha_ij * (v_j + ea_ij * we)
    out = jnp.dot(alpha, v, preferred_element_type=jnp.float32)
    out = out + jnp.sum(alpha * ea, axis=-1, keepdims=True) * we

    # beta-gated skip (lin_beta rows pre-combined at packing time)
    b_logit = jnp.sum(out * wb_a + x_r * wb_b, axis=-1, keepdims=True)
    beta = jax.nn.sigmoid(b_logit)
    out = beta * x_r + (1.0 - beta) * out

    if apply_post:                                       # ReLU + LayerNorm (dropout=id)
      lng = vec_ref[vec_base + 4:vec_base + 5, 0:c]
      lnb = vec_ref[vec_base + 5:vec_base + 6, 0:c]
      out = jnp.maximum(out, 0.0)
      mu = jnp.mean(out, axis=-1, keepdims=True)
      var = jnp.mean((out - mu) ** 2, axis=-1, keepdims=True)
      out = (out - mu) * lax.rsqrt(var + eps)
      out = out * lng + lnb
    return out

  x0 = x_ref[...]                                        # [N, Din]
  h = conv_layer(x0, 0, 0 * VEC_ROWS_PER_CONV, True)
  h = conv_layer(h, din, 1 * VEC_ROWS_PER_CONV, True)
  h = conv_layer(h, din + c, 2 * VEC_ROWS_PER_CONV, False)

  # ---- GTN output mlp --------------------------------------------------------
  r_wm = din + 2 * c
  wm = w128_ref[r_wm:r_wm + c, 0:mlp_out]
  bm = vec_ref[VEC_BM:VEC_BM + 1, 0:mlp_out]
  h_mlp = jnp.dot(h, wm, preferred_element_type=jnp.float32) + bm      # [N, mlp_out]

  # node_embeddings = concat([x0, h_mlp]) is never materialized: W1 was split at
  # packing time into an x0-block and an h-block per query slot, so
  # t[node, q*H:(q+1)*H] = node's contribution when used in query slot q.
  w1x = w512_ref[0:din, :]                               # [Din,     4H]
  w1h = w512_ref[din:din + mlp_out, :]                   # [mlp_out, 4H]
  t = (jnp.dot(x0, w1x, preferred_element_type=jnp.float32)
       + jnp.dot(h_mlp, w1h, preferred_element_type=jnp.float32))      # [N, 4H]

  # ---- gathers via in-kernel one-hot selectors (indices live in SMEM) -------
  srow = lax.broadcasted_iota(jnp.int32, (b_pad, n), 0)
  scol = lax.broadcasted_iota(jnp.int32, (b_pad, n), 1)
  z = vec_ref[VEC_B1:VEC_B1 + 1, :]                      # b1 [1, H]
  for qslot in range(4):                                 # start | end | x_1 | x_2
    sel = jnp.zeros((b_pad, n), jnp.float32)
    for bi in range(b):
      cell = (srow == bi) & (scol == qidx_ref[qslot * b + bi])
      sel = jnp.where(cell, 1.0, sel)
    z = z + jnp.dot(sel, t[:, qslot * hidden:(qslot + 1) * hidden],
                    preferred_element_type=jnp.float32)  # [B_pad, H]

  # ---- NodeOrderPredictionMLP (Lin -> ReLU -> LN -> Dropout=id -> Lin -> ReLU -> head)
  z = jnp.maximum(z, 0.0)
  mu = jnp.mean(z, axis=-1, keepdims=True)
  var = jnp.mean((z - mu) ** 2, axis=-1, keepdims=True)
  z = (z - mu) * lax.rsqrt(var + eps)
  z = z * vec_ref[VEC_PLNG:VEC_PLNG + 1, :] + vec_ref[VEC_PLNB:VEC_PLNB + 1, :]

  r_w2 = din + 3 * c
  z = jnp.dot(z, w128_ref[r_w2:r_w2 + hidden, :],
              preferred_element_type=jnp.float32) + vec_ref[VEC_B2:VEC_B2 + 1, :]
  z = jnp.maximum(z, 0.0)

  # head as VPU mul + row-sum (avoids a 1-lane-output MXU matmul)
  pred = (jnp.sum(z * vec_ref[VEC_WH:VEC_WH + 1, :], axis=-1, keepdims=True)
          + vec_ref[VEC_BH:VEC_BH + 1, 0:1])                           # [B_pad, 1]

  out_ref[...] = jnp.broadcast_to(pred, out_ref.shape)                 # lane-dense store


# -----------------------------------------------------------------------------
# Parameter construction (deterministic, synthetic)
# -----------------------------------------------------------------------------
def _init_linear(key, din, dout, bias=True):
  kw, kb = jax.random.split(key)
  w = jax.random.normal(kw, (din, dout), jnp.float32) / jnp.sqrt(jnp.float32(din))
  b = (jax.random.normal(kb, (1, dout), jnp.float32) * 0.01) if bias \
      else jnp.zeros((1, dout), jnp.float32)
  return w, b


def _init_conv_params(key, din, c):
  ks = jax.random.split(key, 6)
  wq, bq = _init_linear(ks[0], din, c)
  wk, bk = _init_linear(ks[1], din, c)
  wv, bv = _init_linear(ks[2], din, c)
  we, _ = _init_linear(ks[3], 1, c, bias=False)            # lin_edge (no bias)
  ws, bs = _init_linear(ks[4], din, c)                     # lin_skip
  wbeta, _ = _init_linear(ks[5], 3 * c, 1, bias=False)     # lin_beta (no bias)
  return dict(wq=wq, bq=bq, wk=wk, bk=bk, wv=wv, bv=bv, we=we, ws=ws, bs=bs,
              wbeta=wbeta,
              lng=jnp.ones((1, c), jnp.float32), lnb=jnp.zeros((1, c), jnp.float32))


def init_gttp_params(key, input_dim, gtn_hidden, embed_dim, mlp_hidden=128):
  ks = jax.random.split(key, 8)
  params = {}
  params["conv0"] = _init_conv_params(ks[0], input_dim, gtn_hidden)
  params["conv1"] = _init_conv_params(ks[1], gtn_hidden, gtn_hidden)
  params["conv2"] = _init_conv_params(ks[2], gtn_hidden, gtn_hidden)
  wm, bm = _init_linear(ks[3], gtn_hidden, embed_dim - input_dim)
  params["gtn_mlp"] = dict(w=wm, b=bm)
  w1, b1 = _init_linear(ks[4], embed_dim * 4, mlp_hidden)
  w2, b2 = _init_linear(ks[5], mlp_hidden, mlp_hidden)
  wh, bh = _init_linear(ks[6], mlp_hidden, 1)
  params["pair_mlp"] = dict(w1=w1, b1=b1, w2=w2, b2=b2, wh=wh, bh=bh,
                            lng=jnp.ones((1, mlp_hidden), jnp.float32),
                            lnb=jnp.zeros((1, mlp_hidden), jnp.float32))
  return params


def _pad_row(v, width=LANE):
  v = jnp.asarray(v, jnp.float32).reshape(1, -1)
  return jnp.pad(v, ((0, 0), (0, width - v.shape[1])))


def pack_gttp_params(params, input_dim, gtn_hidden, embed_dim, mlp_hidden=128):
  """Pack all parameters into 3 lane-dense slabs (static-offset layout)."""
  c, din, hidden = gtn_hidden, input_dim, mlp_hidden
  mlp_out = embed_dim - din
  assert 4 * c <= LANE and hidden == LANE
  scale = float(c) ** -0.5

  w128_rows, vec_rows = [], []
  for name in ("conv0", "conv1", "conv2"):
    p = params[name]
    # fused Q|K|V|skip projection; attention scale folded into wq / bq
    wqkvs = jnp.concatenate([p["wq"] * scale, p["wk"], p["wv"], p["ws"]], axis=1)
    w128_rows.append(jnp.pad(wqkvs, ((0, 0), (0, LANE - 4 * c))))
    bqkvs = jnp.concatenate([p["bq"] * scale, p["bk"], p["bv"], p["bs"]], axis=1)
    wb = p["wbeta"].reshape(3, c)                          # rows: out | x_r | out - x_r
    vec_rows += [_pad_row(bqkvs), _pad_row(p["we"].reshape(1, c)),
                 _pad_row(wb[0] + wb[2]), _pad_row(wb[1] - wb[2]),
                 _pad_row(p["lng"]), _pad_row(p["lnb"])]

  # GTN output mlp
  wm = params["gtn_mlp"]["w"]                              # [c, mlp_out]
  w128_rows.append(jnp.pad(wm, ((0, 0), (0, LANE - mlp_out))))
  vec_rows.append(_pad_row(params["gtn_mlp"]["b"]))        # VEC_BM

  # pair MLP: split W1 per query slot into x0-part / h-part (removes concats)
  pm = params["pair_mlp"]
  w1x_blocks, w1h_blocks = [], []
  for q in range(4):
    blk = pm["w1"][q * embed_dim:(q + 1) * embed_dim]      # [embed, hidden]
    w1x_blocks.append(blk[:din])
    w1h_blocks.append(blk[din:])
  w512 = jnp.concatenate([jnp.concatenate(w1x_blocks, axis=1),
                          jnp.concatenate(w1h_blocks, axis=1)], axis=0)
  w512 = jnp.pad(w512, ((0, (-w512.shape[0]) % 8), (0, 0)))

  w128_rows.append(jnp.pad(pm["w2"], ((0, 0), (0, LANE - hidden))))
  vec_rows += [_pad_row(pm["b1"]), _pad_row(pm["lng"]), _pad_row(pm["lnb"]),
               _pad_row(pm["b2"]), _pad_row(pm["wh"].reshape(1, -1)),
               _pad_row(pm["bh"].reshape(1, 1))]

  w128 = jnp.concatenate(w128_rows, axis=0)
  assert w128.shape[0] == din + 3 * c + hidden
  vec = jnp.concatenate(vec_rows, axis=0)
  assert vec.shape[0] == VEC_TOTAL
  vec = jnp.pad(vec, ((0, (-vec.shape[0]) % 8), (0, 0)))
  return dict(w128=w128, w512=w512, vec=vec)


# -----------------------------------------------------------------------------
# Forward pass (GTTP) -- single fused pallas_call, 7 inputs
# -----------------------------------------------------------------------------
def gttp_forward(packed, x, edge_index, edge_attr, start_idx, end_idx, x_1, x_2,
                 *, gtn_hidden, embed_dim, mlp_hidden=128):
  n, din = x.shape
  e = edge_index.shape[1]
  b = start_idx.shape[0]
  b_pad = ((b + 7) // 8) * 8                               # full-sublane stores

  ei_flat = edge_index.reshape(-1).astype(jnp.int32)       # [src..., dst...]
  ea_flat = edge_attr.reshape(-1).astype(jnp.float32)      # [E]
  qidx = jnp.concatenate([start_idx, end_idx, x_1, x_2]).astype(jnp.int32)  # [4B]

  kern = functools.partial(
      _gttp_fused_kernel, din=din, c=gtn_hidden, n=n, e=e, b=b, b_pad=b_pad,
      mlp_out=embed_dim - din, hidden=mlp_hidden)

  out = pl.pallas_call(
      kern,
      out_shape=jax.ShapeDtypeStruct((b_pad, LANE), jnp.float32),
      in_specs=[
          pl.BlockSpec(memory_space=pltpu.MemorySpace.VMEM),   # x
          pl.BlockSpec(memory_space=pltpu.MemorySpace.SMEM),   # edge_index (int32)
          pl.BlockSpec(memory_space=pltpu.MemorySpace.SMEM),   # edge_attr  (f32)
          pl.BlockSpec(memory_space=pltpu.MemorySpace.SMEM),   # query indices
          pl.BlockSpec(memory_space=pltpu.MemorySpace.VMEM),   # w128 slab
          pl.BlockSpec(memory_space=pltpu.MemorySpace.VMEM),   # w512 slab
          pl.BlockSpec(memory_space=pltpu.MemorySpace.VMEM),   # vec slab
      ],
      out_specs=pl.BlockSpec(memory_space=pltpu.MemorySpace.VMEM),
  )(x, ei_flat, ea_flat, qidx, packed["w128"], packed["w512"], packed["vec"])
  return out[:b, :1]                                        # [B, 1]


# -----------------------------------------------------------------------------
# Pure-JAX reference (unpacked params, PyG TransformerConv semantics)
# -----------------------------------------------------------------------------
def gttp_reference(params, x, edge_index, edge_attr, start_idx, end_idx, x_1, x_2,
                   eps=1e-5):
  n = x.shape[0]
  src, dst = edge_index[0], edge_index[1]
  mask = jnp.zeros((n, n), jnp.float32).at[dst, src].set(1.0)
  ea = jnp.zeros((n, n), jnp.float32).at[dst, src].set(edge_attr[:, 0])

  def conv(h, p, apply_post):
    c = p["wq"].shape[1]
    q = h @ p["wq"] + p["bq"]
    k = h @ p["wk"] + p["bk"]
    v = h @ p["wv"] + p["bv"]
    xr = h @ p["ws"] + p["bs"]
    we = p["we"].reshape(1, c)
    scores = (q @ k.T + ea * jnp.sum(q * we, axis=-1, keepdims=True)) / jnp.sqrt(
        jnp.float32(c))
    masked = jnp.where(mask > 0, scores, -jnp.inf)
    m = jnp.max(masked, axis=-1, keepdims=True)
    m = jnp.where(jnp.isfinite(m), m, 0.0)
    pexp = jnp.exp(masked - m) * mask
    denom = jnp.sum(pexp, axis=-1, keepdims=True)
    alpha = pexp / jnp.where(denom > 0, denom, 1.0)
    out = alpha @ v + jnp.sum(alpha * ea, axis=-1, keepdims=True) * we
    wb = p["wbeta"].reshape(3, c)
    logit = jnp.sum(out * wb[0] + xr * wb[1] + (out - xr) * wb[2], axis=-1,
                    keepdims=True)
    beta = jax.nn.sigmoid(logit)
    out = beta * xr + (1.0 - beta) * out
    if apply_post:
      out = jnp.maximum(out, 0.0)
      mu = jnp.mean(out, -1, keepdims=True)
      var = jnp.mean((out - mu) ** 2, -1, keepdims=True)
      out = (out - mu) / jnp.sqrt(var + eps) * p["lng"] + p["lnb"]
    return out

  h = conv(x, params["conv0"], True)
  h = conv(h, params["conv1"], True)
  h = conv(h, params["conv2"], False)
  h = h @ params["gtn_mlp"]["w"] + params["gtn_mlp"]["b"]
  ne = jnp.concatenate([x, h], axis=-1)
  pairs = jnp.concatenate([ne[start_idx], ne[end_idx], ne[x_1], ne[x_2]], axis=-1)
  pm = params["pair_mlp"]
  z = pairs @ pm["w1"] + pm["b1"]
  z = jnp.maximum(z, 0.0)
  mu = jnp.mean(z, -1, keepdims=True)
  var = jnp.mean((z - mu) ** 2, -1, keepdims=True)
  z = (z - mu) / jnp.sqrt(var + eps) * pm["lng"] + pm["lnb"]
  z = jnp.maximum(z @ pm["w2"] + pm["b2"], 0.0)
  return z @ pm["wh"] + pm["bh"]


# -----------------------------------------------------------------------------
if __name__ == "__main__":
  INPUT_DIM = 8
  GTN_HIDDEN = 32
  EMBED_DIM = 16
  MLP_HIDDEN = 128
  N_NODES = 8
  BATCH = 4

  key = jax.random.PRNGKey(0)
  k_par, k_x, k_ea, k_idx = jax.random.split(key, 4)

  params = init_gttp_params(k_par, INPUT_DIM, GTN_HIDDEN, EMBED_DIM, MLP_HIDDEN)
  packed = pack_gttp_params(params, INPUT_DIM, GTN_HIDDEN, EMBED_DIM, MLP_HIDDEN)

  x = jax.random.normal(k_x, (N_NODES, INPUT_DIM), jnp.float32)

  # deterministic unique edge list: ring + skip-3 connections (E = 16)
  src = jnp.array([i for i in range(N_NODES)] * 2, jnp.int32)
  dst = jnp.array([(i + 1) % N_NODES for i in range(N_NODES)]
                  + [(i + 3) % N_NODES for i in range(N_NODES)], jnp.int32)
  edge_index = jnp.stack([src, dst], axis=0)                 # [2, 16]
  edge_attr = jax.random.normal(k_ea, (edge_index.shape[1], 1), jnp.float32)

  ks, ke, k1, k2 = jax.random.split(k_idx, 4)
  start_idx = jax.random.randint(ks, (BATCH,), 0, N_NODES)
  end_idx = jax.random.randint(ke, (BATCH,), 0, N_NODES)
  x_1 = jax.random.randint(k1, (BATCH,), 0, N_NODES)
  x_2 = jax.random.randint(k2, (BATCH,), 0, N_NODES)

  fwd = jax.jit(functools.partial(gttp_forward, gtn_hidden=GTN_HIDDEN,
                                  embed_dim=EMBED_DIM, mlp_hidden=MLP_HIDDEN))
  pred = jax.block_until_ready(
      fwd(packed, x, edge_index, edge_attr, start_idx, end_idx, x_1, x_2))

  ref = gttp_reference(params, x, edge_index, edge_attr,
                       start_idx, end_idx, x_1, x_2)
  assert pred.shape == (BATCH, 1)
  assert bool(jnp.all(jnp.isfinite(pred)))
  assert bool(jnp.allclose(pred, ref, rtol=2e-3, atol=2e-4)), (pred, ref)
  print("KERNEL_OK")
</pallas_src>

<mosaic_0001>
module attributes {stable_mosaic.version = 11 : i64} {
  func.func @_gttp_fused_kernel(%arg0: memref<8x8xf32, #tpu.memory_space<vmem>>, %arg1: memref<32xi32, #tpu.memory_space<smem>>, %arg2: memref<16xf32, #tpu.memory_space<smem>>, %arg3: memref<16xi32, #tpu.memory_space<smem>>, %arg4: memref<232x128xf32, #tpu.memory_space<vmem>>, %arg5: memref<16x512xf32, #tpu.memory_space<vmem>>, %arg6: memref<32x128xf32, #tpu.memory_space<vmem>>, %arg7: memref<8x128xf32, #tpu.memory_space<vmem>>) attributes {dimension_semantics = [], scalar_prefetch = 0 : i64, scratch_operands = 0 : i64, tpu.core_type = #tpu.core_type<tc>} {
    %0 = tpu.iota {dimensions = array<i32: 0>} : vector<8x8xi32>
    %1 = tpu.iota {dimensions = array<i32: 1>} : vector<8x8xi32>
    %cst = arith.constant 0.000000e+00 : f32
    %2 = vector.broadcast %cst : f32 to vector<8x8xf32>
    %cst_0 = arith.constant 0.000000e+00 : f32
    %3 = vector.broadcast %cst_0 : f32 to vector<8x8xf32>
    %c0 = arith.constant 0 : index
    %4 = memref.load %arg1[%c0] : memref<32xi32, #tpu.memory_space<smem>>
    %c16 = arith.constant 16 : index
    %5 = memref.load %arg1[%c16] : memref<32xi32, #tpu.memory_space<smem>>
    %6 = vector.broadcast %5 : i32 to vector<8x8xi32>
    %7 = arith.cmpi eq, %0, %6 : vector<8x8xi32>
    %8 = vector.broadcast %4 : i32 to vector<8x8xi32>
    %9 = arith.cmpi eq, %1, %8 : vector<8x8xi32>
    %10 = arith.andi %7, %9 : vector<8x8xi1>
    %cst_1 = arith.constant 1.000000e+00 : f32
    %11 = vector.broadcast %cst_1 : f32 to vector<8x8xf32>
    %12 = arith.select %10, %11, %2 : vector<8x8xi1>, vector<8x8xf32>
    %c0_2 = arith.constant 0 : index
    %13 = memref.load %arg2[%c0_2] : memref<16xf32, #tpu.memory_space<smem>>
    %14 = vector.broadcast %13 : f32 to vector<8x8xf32>
    %15 = arith.select %10, %14, %3 : vector<8x8xi1>, vector<8x8xf32>
    %c1 = arith.constant 1 : index
    %16 = memref.load %arg1[%c1] : memref<32xi32, #tpu.memory_space<smem>>
    %c17 = arith.constant 17 : index
    %17 = memref.load %arg1[%c17] : memref<32xi32, #tpu.memory_space<smem>>
    %18 = vector.broadcast %17 : i32 to vector<8x8xi32>
    %19 = arith.cmpi eq, %0, %18 : vector<8x8xi32>
    %20 = vector.broadcast %16 : i32 to vector<8x8xi32>
    %21 = arith.cmpi eq, %1, %20 : vector<8x8xi32>
    %22 = arith.andi %19, %21 : vector<8x8xi1>
    %cst_3 = arith.constant 1.000000e+00 : f32
    %23 = vector.broadcast %cst_3 : f32 to vector<8x8xf32>
    %24 = arith.select %22, %23, %12 : vector<8x8xi1>, vector<8x8xf32>
    %c1_4 = arith.constant 1 : index
    %25 = memref.load %arg2[%c1_4] : memref<16xf32, #tpu.memory_space<smem>>
    %26 = vector.broadcast %25 : f32 to vector<8x8xf32>
    %27 = arith.select %22, %26, %15 : vector<8x8xi1>, vector<8x8xf32>
    %c2 = arith.constant 2 : index
    %28 = memref.load %arg1[%c2] : memref<32xi32, #tpu.memory_space<smem>>
    %c18 = arith.constant 18 : index
    %29 = memref.load %arg1[%c18] : memref<32xi32, #tpu.memory_space<smem>>
    %30 = vector.broadcast %29 : i32 to vector<8x8xi32>
    %31 = arith.cmpi eq, %0, %30 : vector<8x8xi32>
    %32 = vector.broadcast %28 : i32 to vector<8x8xi32>
    %33 = arith.cmpi eq, %1, %32 : vector<8x8xi32>
    %34 = arith.andi %31, %33 : vector<8x8xi1>
    %cst_5 = arith.constant 1.000000e+00 : f32
    %35 = vector.broadcast %cst_5 : f32 to vector<8x8xf32>
    %36 = arith.select %34, %35, %24 : vector<8x8xi1>, vector<8x8xf32>
    %c2_6 = arith.constant 2 : index
    %37 = memref.load %arg2[%c2_6] : memref<16xf32, #tpu.memory_space<smem>>
    %38 = vector.broadcast %37 : f32 to vector<8x8xf32>
    %39 = arith.select %34, %38, %27 : vector<8x8xi1>, vector<8x8xf32>
    %c3 = arith.constant 3 : index
    %40 = memref.load %arg1[%c3] : memref<32xi32, #tpu.memory_space<smem>>
    %c19 = arith.constant 19 : index
    %41 = memref.load %arg1[%c19] : memref<32xi32, #tpu.memory_space<smem>>
    %42 = vector.broadcast %41 : i32 to vector<8x8xi32>
    %43 = arith.cmpi eq, %0, %42 : vector<8x8xi32>
    %44 = vector.broadcast %40 : i32 to vector<8x8xi32>
    %45 = arith.cmpi eq, %1, %44 : vector<8x8xi32>
    %46 = arith.andi %43, %45 : vector<8x8xi1>
    %cst_7 = arith.constant 1.000000e+00 : f32
    %47 = vector.broadcast %cst_7 : f32 to vector<8x8xf32>
    %48 = arith.select %46, %47, %36 : vector<8x8xi1>, vector<8x8xf32>
    %c3_8 = arith.constant 3 : index
    %49 = memref.load %arg2[%c3_8] : memref<16xf32, #tpu.memory_space<smem>>
    %50 = vector.broadcast %49 : f32 to vector<8x8xf32>
    %51 = arith.select %46, %50, %39 : vector<8x8xi1>, vector<8x8xf32>
    %c4 = arith.constant 4 : index
    %52 = memref.load %arg1[%c4] : memref<32xi32, #tpu.memory_space<smem>>
    %c20 = arith.constant 20 : index
    %53 = memref.load %arg1[%c20] : memref<32xi32, #tpu.memory_space<smem>>
    %54 = vector.broadcast %53 : i32 to vector<8x8xi32>
    %55 = arith.cmpi eq, %0, %54 : vector<8x8xi32>
    %56 = vector.broadcast %52 : i32 to vector<8x8xi32>
    %57 = arith.cmpi eq, %1, %56 : vector<8x8xi32>
    %58 = arith.andi %55, %57 : vector<8x8xi1>
    %cst_9 = arith.constant 1.000000e+00 : f32
    %59 = vector.broadcast %cst_9 : f32 to vector<8x8xf32>
    %60 = arith.select %58, %59, %48 : vector<8x8xi1>, vector<8x8xf32>
    %c4_10 = arith.constant 4 : index
    %61 = memref.load %arg2[%c4_10] : memref<16xf32, #tpu.memory_space<smem>>
    %62 = vector.broadcast %61 : f32 to vector<8x8xf32>
    %63 = arith.select %58, %62, %51 : vector<8x8xi1>, vector<8x8xf32>
    %c5 = arith.constant 5 : index
    %64 = memref.load %arg1[%c5] : memref<32xi32, #tpu.memory_space<smem>>
    %c21 = arith.constant 21 : index
    %65 = memref.load %arg1[%c21] : memref<32xi32, #tpu.memory_space<smem>>
    %66 = vector.broadcast %65 : i32 to vector<8x8xi32>
    %67 = arith.cmpi eq, %0, %66 : vector<8x8xi32>
    %68 = vector.broadcast %64 : i32 to vector<8x8xi32>
    %69 = arith.cmpi eq, %1, %68 : vector<8x8xi32>
    %70 = arith.andi %67, %69 : vector<8x8xi1>
    %cst_11 = arith.constant 1.000000e+00 : f32
    %71 = vector.broadcast %cst_11 : f32 to vector<8x8xf32>
    %72 = arith.select %70, %71, %60 : vector<8x8xi1>, vector<8x8xf32>
    %c5_12 = arith.constant 5 : index
    %73 = memref.load %arg2[%c5_12] : memref<16xf32, #tpu.memory_space<smem>>
    %74 = vector.broadcast %73 : f32 to vector<8x8xf32>
    %75 = arith.select %70, %74, %63 : vector<8x8xi1>, vector<8x8xf32>
    %c6 = arith.constant 6 : index
    %76 = memref.load %arg1[%c6] : memref<32xi32, #tpu.memory_space<smem>>
    %c22 = arith.constant 22 : index
    %77 = memref.load %arg1[%c22] : memref<32xi32, #tpu.memory_space<smem>>
    %78 = vector.broadcast %77 : i32 to vector<8x8xi32>
    %79 = arith.cmpi eq, %0, %78 : vector<8x8xi32>
    %80 = vector.broadcast %76 : i32 to vector<8x8xi32>
    %81 = arith.cmpi eq, %1, %80 : vector<8x8xi32>
    %82 = arith.andi %79, %81 : vector<8x8xi1>
    %cst_13 = arith.constant 1.000000e+00 : f32
    %83 = vector.broadcast %cst_13 : f32 to vector<8x8xf32>
    %84 = arith.select %82, %83, %72 : vector<8x8xi1>, vector<8x8xf32>
    %c6_14 = arith.constant 6 : index
    %85 = memref.load %arg2[%c6_14] : memref<16xf32, #tpu.memory_space<smem>>
    %86 = vector.broadcast %85 : f32 to vector<8x8xf32>
    %87 = arith.select %82, %86, %75 : vector<8x8xi1>, vector<8x8xf32>
    %c7 = arith.constant 7 : index
    %88 = memref.load %arg1[%c7] : memref<32xi32, #tpu.memory_space<smem>>
    %c23 = arith.constant 23 : index
    %89 = memref.load %arg1[%c23] : memref<32xi32, #tpu.memory_space<smem>>
    %90 = vector.broadcast %89 : i32 to vector<8x8xi32>
    %91 = arith.cmpi eq, %0, %90 : vector<8x8xi32>
    %92 = vector.broadcast %88 : i32 to vector<8x8xi32>
    %93 = arith.cmpi eq, %1, %92 : vector<8x8xi32>
    %94 = arith.andi %91, %93 : vector<8x8xi1>
    %cst_15 = arith.constant 1.000000e+00 : f32
    %95 = vector.broadcast %cst_15 : f32 to vector<8x8xf32>
    %96 = arith.select %94, %95, %84 : vector<8x8xi1>, vector<8x8xf32>
    %c7_16 = arith.constant 7 : index
    %97 = memref.load %arg2[%c7_16] : memref<16xf32, #tpu.memory_space<smem>>
    %98 = vector.broadcast %97 : f32 to vector<8x8xf32>
    %99 = arith.select %94, %98, %87 : vector<8x8xi1>, vector<8x8xf32>
    %c8 = arith.constant 8 : index
    %100 = memref.load %arg1[%c8] : memref<32xi32, #tpu.memory_space<smem>>
    %c24 = arith.constant 24 : index
    %101 = memref.load %arg1[%c24] : memref<32xi32, #tpu.memory_space<smem>>
    %102 = vector.broadcast %101 : i32 to vector<8x8xi32>
    %103 = arith.cmpi eq, %0, %102 : vector<8x8xi32>
    %104 = vector.broadcast %100 : i32 to vector<8x8xi32>
    %105 = arith.cmpi eq, %1, %104 : vector<8x8xi32>
    %106 = arith.andi %103, %105 : vector<8x8xi1>
    %cst_17 = arith.constant 1.000000e+00 : f32
    %107 = vector.broadcast %cst_17 : f32 to vector<8x8xf32>
    %108 = arith.select %106, %107, %96 : vector<8x8xi1>, vector<8x8xf32>
    %c8_18 = arith.constant 8 : index
    %109 = memref.load %arg2[%c8_18] : memref<16xf32, #tpu.memory_space<smem>>
    %110 = vector.broadcast %109 : f32 to vector<8x8xf32>
    %111 = arith.select %106, %110, %99 : vector<8x8xi1>, vector<8x8xf32>
    %c9 = arith.constant 9 : index
    %112 = memref.load %arg1[%c9] : memref<32xi32, #tpu.memory_space<smem>>
    %c25 = arith.constant 25 : index
    %113 = memref.load %arg1[%c25] : memref<32xi32, #tpu.memory_space<smem>>
    %114 = vector.broadcast %113 : i32 to vector<8x8xi32>
    %115 = arith.cmpi eq, %0, %114 : vector<8x8xi32>
    %116 = vector.broadcast %112 : i32 to vector<8x8xi32>
    %117 = arith.cmpi eq, %1, %116 : vector<8x8xi32>
    %118 = arith.andi %115, %117 : vector<8x8xi1>
    %cst_19 = arith.constant 1.000000e+00 : f32
    %119 = vector.broadcast %cst_19 : f32 to vector<8x8xf32>
    %120 = arith.select %118, %119, %108 : vector<8x8xi1>, vector<8x8xf32>
    %c9_20 = arith.constant 9 : index
    %121 = memref.load %arg2[%c9_20] : memref<16xf32, #tpu.memory_space<smem>>
    %122 = vector.broadcast %121 : f32 to vector<8x8xf32>
    %123 = arith.select %118, %122, %111 : vector<8x8xi1>, vector<8x8xf32>
    %c10 = arith.constant 10 : index
    %124 = memref.load %arg1[%c10] : memref<32xi32, #tpu.memory_space<smem>>
    %c26 = arith.constant 26 : index
    %125 = memref.load %arg1[%c26] : memref<32xi32, #tpu.memory_space<smem>>
    %126 = vector.broadcast %125 : i32 to vector<8x8xi32>
    %127 = arith.cmpi eq, %0, %126 : vector<8x8xi32>
    %128 = vector.broadcast %124 : i32 to vector<8x8xi32>
    %129 = arith.cmpi eq, %1, %128 : vector<8x8xi32>
    %130 = arith.andi %127, %129 : vector<8x8xi1>
    %cst_21 = arith.constant 1.000000e+00 : f32
    %131 = vector.broadcast %cst_21 : f32 to vector<8x8xf32>
    %132 = arith.select %130, %131, %120 : vector<8x8xi1>, vector<8x8xf32>
    %c10_22 = arith.constant 10 : index
    %133 = memref.load %arg2[%c10_22] : memref<16xf32, #tpu.memory_space<smem>>
    %134 = vector.broadcast %133 : f32 to vector<8x8xf32>
    %135 = arith.select %130, %134, %123 : vector<8x8xi1>, vector<8x8xf32>
    %c11 = arith.constant 11 : index
    %136 = memref.load %arg1[%c11] : memref<32xi32, #tpu.memory_space<smem>>
    %c27 = arith.constant 27 : index
    %137 = memref.load %arg1[%c27] : memref<32xi32, #tpu.memory_space<smem>>
    %138 = vector.broadcast %137 : i32 to vector<8x8xi32>
    %139 = arith.cmpi eq, %0, %138 : vector<8x8xi32>
    %140 = vector.broadcast %136 : i32 to vector<8x8xi32>
    %141 = arith.cmpi eq, %1, %140 : vector<8x8xi32>
    %142 = arith.andi %139, %141 : vector<8x8xi1>
    %cst_23 = arith.constant 1.000000e+00 : f32
    %143 = vector.broadcast %cst_23 : f32 to vector<8x8xf32>
    %144 = arith.select %142, %143, %132 : vector<8x8xi1>, vector<8x8xf32>
    %c11_24 = arith.constant 11 : index
    %145 = memref.load %arg2[%c11_24] : memref<16xf32, #tpu.memory_space<smem>>
    %146 = vector.broadcast %145 : f32 to vector<8x8xf32>
    %147 = arith.select %142, %146, %135 : vector<8x8xi1>, vector<8x8xf32>
    %c12 = arith.constant 12 : index
    %148 = memref.load %arg1[%c12] : memref<32xi32, #tpu.memory_space<smem>>
    %c28 = arith.constant 28 : index
    %149 = memref.load %arg1[%c28] : memref<32xi32, #tpu.memory_space<smem>>
    %150 = vector.broadcast %149 : i32 to vector<8x8xi32>
    %151 = arith.cmpi eq, %0, %150 : vector<8x8xi32>
    %152 = vector.broadcast %148 : i32 to vector<8x8xi32>
    %153 = arith.cmpi eq, %1, %152 : vector<8x8xi32>
    %154 = arith.andi %151, %153 : vector<8x8xi1>
    %cst_25 = arith.constant 1.000000e+00 : f32
    %155 = vector.broadcast %cst_25 : f32 to vector<8x8xf32>
    %156 = arith.select %154, %155, %144 : vector<8x8xi1>, vector<8x8xf32>
    %c12_26 = arith.constant 12 : index
    %157 = memref.load %arg2[%c12_26] : memref<16xf32, #tpu.memory_space<smem>>
    %158 = vector.broadcast %157 : f32 to vector<8x8xf32>
    %159 = arith.select %154, %158, %147 : vector<8x8xi1>, vector<8x8xf32>
    %c13 = arith.constant 13 : index
    %160 = memref.load %arg1[%c13] : memref<32xi32, #tpu.memory_space<smem>>
    %c29 = arith.constant 29 : index
    %161 = memref.load %arg1[%c29] : memref<32xi32, #tpu.memory_space<smem>>
    %162 = vector.broadcast %161 : i32 to vector<8x8xi32>
    %163 = arith.cmpi eq, %0, %162 : vector<8x8xi32>
    %164 = vector.broadcast %160 : i32 to vector<8x8xi32>
    %165 = arith.cmpi eq, %1, %164 : vector<8x8xi32>
    %166 = arith.andi %163, %165 : vector<8x8xi1>
    %cst_27 = arith.constant 1.000000e+00 : f32
    %167 = vector.broadcast %cst_27 : f32 to vector<8x8xf32>
    %168 = arith.select %166, %167, %156 : vector<8x8xi1>, vector<8x8xf32>
    %c13_28 = arith.constant 13 : index
    %169 = memref.load %arg2[%c13_28] : memref<16xf32, #tpu.memory_space<smem>>
    %170 = vector.broadcast %169 : f32 to vector<8x8xf32>
    %171 = arith.select %166, %170, %159 : vector<8x8xi1>, vector<8x8xf32>
    %c14 = arith.constant 14 : index
    %172 = memref.load %arg1[%c14] : memref<32xi32, #tpu.memory_space<smem>>
    %c30 = arith.constant 30 : index
    %173 = memref.load %arg1[%c30] : memref<32xi32, #tpu.memory_space<smem>>
    %174 = vector.broadcast %173 : i32 to vector<8x8xi32>
    %175 = arith.cmpi eq, %0, %174 : vector<8x8xi32>
    %176 = vector.broadcast %172 : i32 to vector<8x8xi32>
    %177 = arith.cmpi eq, %1, %176 : vector<8x8xi32>
    %178 = arith.andi %175, %177 : vector<8x8xi1>
    %cst_29 = arith.constant 1.000000e+00 : f32
    %179 = vector.broadcast %cst_29 : f32 to vector<8x8xf32>
    %180 = arith.select %178, %179, %168 : vector<8x8xi1>, vector<8x8xf32>
    %c14_30 = arith.constant 14 : index
    %181 = memref.load %arg2[%c14_30] : memref<16xf32, #tpu.memory_space<smem>>
    %182 = vector.broadcast %181 : f32 to vector<8x8xf32>
    %183 = arith.select %178, %182, %171 : vector<8x8xi1>, vector<8x8xf32>
    %c15 = arith.constant 15 : index
    %184 = memref.load %arg1[%c15] : memref<32xi32, #tpu.memory_space<smem>>
    %c31 = arith.constant 31 : index
    %185 = memref.load %arg1[%c31] : memref<32xi32, #tpu.memory_space<smem>>
    %186 = vector.broadcast %185 : i32 to vector<8x8xi32>
    %187 = arith.cmpi eq, %0, %186 : vector<8x8xi32>
    %188 = vector.broadcast %184 : i32 to vector<8x8xi32>
    %189 = arith.cmpi eq, %1, %188 : vector<8x8xi32>
    %190 = arith.andi %187, %189 : vector<8x8xi1>
    %cst_31 = arith.constant 1.000000e+00 : f32
    %191 = vector.broadcast %cst_31 : f32 to vector<8x8xf32>
    %192 = arith.select %190, %191, %180 : vector<8x8xi1>, vector<8x8xf32>
    %c15_32 = arith.constant 15 : index
    %193 = memref.load %arg2[%c15_32] : memref<16xf32, #tpu.memory_space<smem>>
    %194 = vector.broadcast %193 : f32 to vector<8x8xf32>
    %195 = arith.select %190, %194, %183 : vector<8x8xi1>, vector<8x8xf32>
    %cst_33 = arith.constant 1.000000e+00 : f32
    %196 = vector.broadcast %cst_33 : f32 to vector<8x8xf32>
    %197 = arith.subf %192, %196 : vector<8x8xf32>
    %cst_34 = arith.constant 1.000000e+30 : f32
    %198 = vector.broadcast %cst_34 : f32 to vector<8x8xf32>
    %199 = arith.mulf %197, %198 : vector<8x8xf32>
    %c0_35 = arith.constant 0 : index
    %c0_36 = arith.constant 0 : index
    %200 = vector.load %arg0[%c0_35, %c0_36] : memref<8x8xf32, #tpu.memory_space<vmem>>, vector<8x8xf32>
    %c0_37 = arith.constant 0 : index
    %c0_38 = arith.constant 0 : index
    %201 = vector.load %arg4[%c0_37, %c0_38] : memref<232x128xf32, #tpu.memory_space<vmem>>, vector<8x128xf32>
    %c0_39 = arith.constant 0 : index
    %c0_40 = arith.constant 0 : index
    %202 = vector.load %arg6[%c0_39, %c0_40] : memref<32x128xf32, #tpu.memory_space<vmem>>, vector<1x128xf32>
    %c1_41 = arith.constant 1 : index
    %c0_42 = arith.constant 0 : index
    %203 = vector.load %arg6[%c1_41, %c0_42] : memref<32x128xf32, #tpu.memory_space<vmem>>, vector<1x32xf32>
    %c2_43 = arith.constant 2 : index
    %c0_44 = arith.constant 0 : index
    %204 = vector.load %arg6[%c2_43, %c0_44] : memref<32x128xf32, #tpu.memory_space<vmem>>, vector<1x32xf32>
    %c3_45 = arith.constant 3 : index
    %c0_46 = arith.constant 0 : index
    %205 = vector.load %arg6[%c3_45, %c0_46] : memref<32x128xf32, #tpu.memory_space<vmem>>, vector<1x32xf32>
    %cst_47 = arith.constant dense<0.000000e+00> : vector<8x128xf32>
    %206 = tpu.matmul %200, %201, %cst_47 {dimension_numbers = #tpu.dot_dimension_numbers<[1], [0], [0], [1], [0, 0, 1, 1], [], []>} : vector<8x8xf32>, vector<8x128xf32>, vector<8x128xf32> -> vector<8x128xf32>
    %207 = vector.broadcast %202 : vector<1x128xf32> to vector<8x128xf32>
    %208 = arith.addf %206, %207 : vector<8x128xf32>
    %209 = vector.extract_strided_slice %208 {offsets = [0, 0], sizes = [8, 32], strides = [1, 1]} : vector<8x128xf32> to vector<8x32xf32>
    %210 = vector.extract_strided_slice %208 {offsets = [0, 32], sizes = [8, 32], strides = [1, 1]} : vector<8x128xf32> to vector<8x32xf32>
    %211 = vector.extract_strided_slice %208 {offsets = [0, 64], sizes = [8, 32], strides = [1, 1]} : vector<8x128xf32> to vector<8x32xf32>
    %212 = vector.extract_strided_slice %208 {offsets = [0, 96], sizes = [8, 32], strides = [1, 1]} : vector<8x128xf32> to vector<8x32xf32>
    %cst_48 = arith.constant dense<0.000000e+00> : vector<8x8xf32>
    %213 = tpu.matmul %209, %210, %cst_48 {dimension_numbers = #tpu.dot_dimension_numbers<[1], [1], [0], [0], [0, 0, 1, 0], [], []>} : vector<8x32xf32>, vector<8x32xf32>, vector<8x8xf32> -> vector<8x8xf32>
    %214 = vector.broadcast %203 : vector<1x32xf32> to vector<8x32xf32>
    %215 = arith.mulf %209, %214 : vector<8x32xf32>
    %cst_49 = arith.constant dense<0.000000e+00> : vector<8xf32>
    %216 = vector.multi_reduction <add>, %215, %cst_49 [1] : vector<8x32xf32> to vector<8xf32>
    %217 = vector.shape_cast %216 : vector<8xf32> to vector<8x1xf32>
    %218 = vector.broadcast %217 : vector<8x1xf32> to vector<8x8xf32>
    %219 = arith.mulf %195, %218 : vector<8x8xf32>
    %220 = arith.addf %213, %219 : vector<8x8xf32>
    %221 = arith.addf %220, %199 : vector<8x8xf32>
    %cst_50 = arith.constant dense<0xFF800000> : vector<8xf32>
    %222 = vector.multi_reduction <maximumf>, %221, %cst_50 [1] : vector<8x8xf32> to vector<8xf32>
    %223 = vector.shape_cast %222 : vector<8xf32> to vector<8x1xf32>
    %224 = vector.broadcast %223 : vector<8x1xf32> to vector<8x8xf32>
    %225 = arith.subf %221, %224 : vector<8x8xf32>
    %226 = math.exp %225 : vector<8x8xf32>
    %227 = arith.mulf %226, %192 : vector<8x8xf32>
    %cst_51 = arith.constant dense<0.000000e+00> : vector<8xf32>
    %228 = vector.multi_reduction <add>, %227, %cst_51 [1] : vector<8x8xf32> to vector<8xf32>
    %229 = vector.shape_cast %228 : vector<8xf32> to vector<8x1xf32>
    %cst_52 = arith.constant 0.000000e+00 : f32
    %230 = vector.broadcast %cst_52 : f32 to vector<8x1xf32>
    %231 = arith.cmpf ogt, %229, %230 : vector<8x1xf32>
    %cst_53 = arith.constant 1.000000e+00 : f32
    %232 = vector.broadcast %cst_53 : f32 to vector<8x1xf32>
    %233 = arith.select %231, %229, %232 : vector<8x1xi1>, vector<8x1xf32>
    %234 = tpu.reciprocal %233 : vector<8x1xf32> -> vector<8x1xf32>
    %235 = vector.broadcast %234 : vector<8x1xf32> to vector<8x8xf32>
    %236 = arith.mulf %227, %235 : vector<8x8xf32>
    %cst_54 = arith.constant dense<0.000000e+00> : vector<8x32xf32>
    %237 = tpu.matmul %236, %211, %cst_54 {dimension_numbers = #tpu.dot_dimension_numbers<[1], [0], [0], [1], [0, 0, 1, 1], [], []>} : vector<8x8xf32>, vector<8x32xf32>, vector<8x32xf32> -> vector<8x32xf32>
    %238 = arith.mulf %236, %195 : vector<8x8xf32>
    %cst_55 = arith.constant dense<0.000000e+00> : vector<8xf32>
    %239 = vector.multi_reduction <add>, %238, %cst_55 [1] : vector<8x8xf32> to vector<8xf32>
    %240 = vector.shape_cast %239 : vector<8xf32> to vector<8x1xf32>
    %241 = vector.broadcast %240 : vector<8x1xf32> to vector<8x32xf32>
    %242 = vector.broadcast %203 : vector<1x32xf32> to vector<8x32xf32>
    %243 = arith.mulf %241, %242 : vector<8x32xf32>
    %244 = arith.addf %237, %243 : vector<8x32xf32>
    %245 = vector.broadcast %204 : vector<1x32xf32> to vector<8x32xf32>
    %246 = arith.mulf %244, %245 : vector<8x32xf32>
    %247 = vector.broadcast %205 : vector<1x32xf32> to vector<8x32xf32>
    %248 = arith.mulf %212, %247 : vector<8x32xf32>
    %249 = arith.addf %246, %248 : vector<8x32xf32>
    %cst_56 = arith.constant dense<0.000000e+00> : vector<8xf32>
    %250 = vector.multi_reduction <add>, %249, %cst_56 [1] : vector<8x32xf32> to vector<8xf32>
    %251 = vector.shape_cast %250 : vector<8xf32> to vector<8x1xf32>
    %252 = arith.negf %251 : vector<8x1xf32>
    %253 = math.exp %252 : vector<8x1xf32>
    %cst_57 = arith.constant 1.000000e+00 : f32
    %254 = vector.broadcast %cst_57 : f32 to vector<8x1xf32>
    %255 = arith.addf %254, %253 : vector<8x1xf32>
    %256 = arith.divf %254, %255 : vector<8x1xf32>
    %257 = vector.broadcast %256 : vector<8x1xf32> to vector<8x32xf32>
    %258 = arith.mulf %257, %212 : vector<8x32xf32>
    %cst_58 = arith.constant 1.000000e+00 : f32
    %259 = vector.broadcast %cst_58 : f32 to vector<8x1xf32>
    %260 = arith.subf %259, %256 : vector<8x1xf32>
    %261 = vector.broadcast %260 : vector<8x1xf32> to vector<8x32xf32>
    %262 = arith.mulf %261, %244 : vector<8x32xf32>
    %263 = arith.addf %258, %262 : vector<8x32xf32>
    %c4_59 = arith.constant 4 : index
    %c0_60 = arith.constant 0 : index
    %264 = vector.load %arg6[%c4_59, %c0_60] : memref<32x128xf32, #tpu.memory_space<vmem>>, vector<1x32xf32>
    %c5_61 = arith.constant 5 : index
    %c0_62 = arith.constant 0 : index
    %265 = vector.load %arg6[%c5_61, %c0_62] : memref<32x128xf32, #tpu.memory_space<vmem>>, vector<1x32xf32>
    %cst_63 = arith.constant 0.000000e+00 : f32
    %266 = vector.broadcast %cst_63 : f32 to vector<8x32xf32>
    %267 = arith.maximumf %263, %266 : vector<8x32xf32>
    %cst_64 = arith.constant dense<0.000000e+00> : vector<8xf32>
    %268 = vector.multi_reduction <add>, %267, %cst_64 [1] : vector<8x32xf32> to vector<8xf32>
    %269 = vector.shape_cast %268 : vector<8xf32> to vector<8x1xf32>
    %cst_65 = arith.constant 3.200000e+01 : f32
    %270 = vector.broadcast %cst_65 : f32 to vector<8x1xf32>
    %271 = arith.divf %269, %270 : vector<8x1xf32>
    %272 = vector.broadcast %271 : vector<8x1xf32> to vector<8x32xf32>
    %273 = arith.subf %267, %272 : vector<8x32xf32>
    %274 = arith.mulf %273, %273 : vector<8x32xf32>
    %cst_66 = arith.constant dense<0.000000e+00> : vector<8xf32>
    %275 = vector.multi_reduction <add>, %274, %cst_66 [1] : vector<8x32xf32> to vector<8xf32>
    %276 = vector.shape_cast %275 : vector<8xf32> to vector<8x1xf32>
    %cst_67 = arith.constant 3.200000e+01 : f32
    %277 = vector.broadcast %cst_67 : f32 to vector<8x1xf32>
    %278 = arith.divf %276, %277 : vector<8x1xf32>
    %279 = vector.broadcast %271 : vector<8x1xf32> to vector<8x32xf32>
    %280 = arith.subf %267, %279 : vector<8x32xf32>
    %cst_68 = arith.constant 9.99999974E-6 : f32
    %281 = vector.broadcast %cst_68 : f32 to vector<8x1xf32>
    %282 = arith.addf %278, %281 : vector<8x1xf32>
    %283 = math.rsqrt %282 : vector<8x1xf32>
    %284 = vector.broadcast %283 : vector<8x1xf32> to vector<8x32xf32>
    %285 = arith.mulf %280, %284 : vector<8x32xf32>
    %286 = vector.broadcast %264 : vector<1x32xf32> to vector<8x32xf32>
    %287 = arith.mulf %285, %286 : vector<8x32xf32>
    %288 = vector.broadcast %265 : vector<1x32xf32> to vector<8x32xf32>
    %289 = arith.addf %287, %288 : vector<8x32xf32>
    %c8_69 = arith.constant 8 : index
    %c0_70 = arith.constant 0 : index
    %290 = vector.load %arg4[%c8_69, %c0_70] : memref<232x128xf32, #tpu.memory_space<vmem>>, vector<32x128xf32>
    %c6_71 = arith.constant 6 : index
    %c0_72 = arith.constant 0 : index
    %291 = vector.load %arg6[%c6_71, %c0_72] : memref<32x128xf32, #tpu.memory_space<vmem>>, vector<1x128xf32>
    %c7_73 = arith.constant 7 : index
    %c0_74 = arith.constant 0 : index
    %292 = vector.load %arg6[%c7_73, %c0_74] : memref<32x128xf32, #tpu.memory_space<vmem>>, vector<1x32xf32>
    %c8_75 = arith.constant 8 : index
    %c0_76 = arith.constant 0 : index
    %293 = vector.load %arg6[%c8_75, %c0_76] : memref<32x128xf32, #tpu.memory_space<vmem>>, vector<1x32xf32>
    %c9_77 = arith.constant 9 : index
    %c0_78 = arith.constant 0 : index
    %294 = vector.load %arg6[%c9_77, %c0_78] : memref<32x128xf32, #tpu.memory_space<vmem>>, vector<1x32xf32>
    %cst_79 = arith.constant dense<0.000000e+00> : vector<8x128xf32>
    %295 = tpu.matmul %289, %290, %cst_79 {dimension_numbers = #tpu.dot_dimension_numbers<[1], [0], [0], [1], [0, 0, 1, 1], [], []>} : vector<8x32xf32>, vector<32x128xf32>, vector<8x128xf32> -> vector<8x128xf32>
    %296 = vector.broadcast %291 : vector<1x128xf32> to vector<8x128xf32>
    %297 = arith.addf %295, %296 : vector<8x128xf32>
    %298 = vector.extract_strided_slice %297 {offsets = [0, 0], sizes = [8, 32], strides = [1, 1]} : vector<8x128xf32> to vector<8x32xf32>
    %299 = vector.extract_strided_slice %297 {offsets = [0, 32], sizes = [8, 32], strides = [1, 1]} : vector<8x128xf32> to vector<8x32xf32>
    %300 = vector.extract_strided_slice %297 {offsets = [0, 64], sizes = [8, 32], strides = [1, 1]} : vector<8x128xf32> to vector<8x32xf32>
    %301 = vector.extract_strided_slice %297 {offsets = [0, 96], sizes = [8, 32], strides = [1, 1]} : vector<8x128xf32> to vector<8x32xf32>
    %cst_80 = arith.constant dense<0.000000e+00> : vector<8x8xf32>
    %302 = tpu.matmul %298, %299, %cst_80 {dimension_numbers = #tpu.dot_dimension_numbers<[1], [1], [0], [0], [0, 0, 1, 0], [], []>} : vector<8x32xf32>, vector<8x32xf32>, vector<8x8xf32> -> vector<8x8xf32>
    %303 = vector.broadcast %292 : vector<1x32xf32> to vector<8x32xf32>
    %304 = arith.mulf %298, %303 : vector<8x32xf32>
    %cst_81 = arith.constant dense<0.000000e+00> : vector<8xf32>
    %305 = vector.multi_reduction <add>, %304, %cst_81 [1] : vector<8x32xf32> to vector<8xf32>
    %306 = vector.shape_cast %305 : vector<8xf32> to vector<8x1xf32>
    %307 = vector.broadcast %306 : vector<8x1xf32> to vector<8x8xf32>
    %308 = arith.mulf %195, %307 : vector<8x8xf32>
    %309 = arith.addf %302, %308 : vector<8x8xf32>
    %310 = arith.addf %309, %199 : vector<8x8xf32>
    %cst_82 = arith.constant dense<0xFF800000> : vector<8xf32>
    %311 = vector.multi_reduction <maximumf>, %310, %cst_82 [1] : vector<8x8xf32> to vector<8xf32>
    %312 = vector.shape_cast %311 : vector<8xf32> to vector<8x1xf32>
    %313 = vector.broadcast %312 : vector<8x1xf32> to vector<8x8xf32>
    %314 = arith.subf %310, %313 : vector<8x8xf32>
    %315 = math.exp %314 : vector<8x8xf32>
    %316 = arith.mulf %315, %192 : vector<8x8xf32>
    %cst_83 = arith.constant dense<0.000000e+00> : vector<8xf32>
    %317 = vector.multi_reduction <add>, %316, %cst_83 [1] : vector<8x8xf32> to vector<8xf32>
    %318 = vector.shape_cast %317 : vector<8xf32> to vector<8x1xf32>
    %cst_84 = arith.constant 0.000000e+00 : f32
    %319 = vector.broadcast %cst_84 : f32 to vector<8x1xf32>
    %320 = arith.cmpf ogt, %318, %319 : vector<8x1xf32>
    %cst_85 = arith.constant 1.000000e+00 : f32
    %321 = vector.broadcast %cst_85 : f32 to vector<8x1xf32>
    %322 = arith.select %320, %318, %321 : vector<8x1xi1>, vector<8x1xf32>
    %323 = tpu.reciprocal %322 : vector<8x1xf32> -> vector<8x1xf32>
    %324 = vector.broadcast %323 : vector<8x1xf32> to vector<8x8xf32>
    %325 = arith.mulf %316, %324 : vector<8x8xf32>
    %cst_86 = arith.constant dense<0.000000e+00> : vector<8x32xf32>
    %326 = tpu.matmul %325, %300, %cst_86 {dimension_numbers = #tpu.dot_dimension_numbers<[1], [0], [0], [1], [0, 0, 1, 1], [], []>} : vector<8x8xf32>, vector<8x32xf32>, vector<8x32xf32> -> vector<8x32xf32>
    %327 = arith.mulf %325, %195 : vector<8x8xf32>
    %cst_87 = arith.constant dense<0.000000e+00> : vector<8xf32>
    %328 = vector.multi_reduction <add>, %327, %cst_87 [1] : vector<8x8xf32> to vector<8xf32>
    %329 = vector.shape_cast %328 : vector<8xf32> to vector<8x1xf32>
    %330 = vector.broadcast %329 : vector<8x1xf32> to vector<8x32xf32>
    %331 = vector.broadcast %292 : vector<1x32xf32> to vector<8x32xf32>
    %332 = arith.mulf %330, %331 : vector<8x32xf32>
    %333 = arith.addf %326, %332 : vector<8x32xf32>
    %334 = vector.broadcast %293 : vector<1x32xf32> to vector<8x32xf32>
    %335 = arith.mulf %333, %334 : vector<8x32xf32>
    %336 = vector.broadcast %294 : vector<1x32xf32> to vector<8x32xf32>
    %337 = arith.mulf %301, %336 : vector<8x32xf32>
    %338 = arith.addf %335, %337 : vector<8x32xf32>
    %cst_88 = arith.constant dense<0.000000e+00> : vector<8xf32>
    %339 = vector.multi_reduction <add>, %338, %cst_88 [1] : vector<8x32xf32> to vector<8xf32>
    %340 = vector.shape_cast %339 : vector<8xf32> to vector<8x1xf32>
    %341 = arith.negf %340 : vector<8x1xf32>
    %342 = math.exp %341 : vector<8x1xf32>
    %cst_89 = arith.constant 1.000000e+00 : f32
    %343 = vector.broadcast %cst_89 : f32 to vector<8x1xf32>
    %344 = arith.addf %343, %342 : vector<8x1xf32>
    %345 = arith.divf %343, %344 : vector<8x1xf32>
    %346 = vector.broadcast %345 : vector<8x1xf32> to vector<8x32xf32>
    %347 = arith.mulf %346, %301 : vector<8x32xf32>
    %cst_90 = arith.constant 1.000000e+00 : f32
    %348 = vector.broadcast %cst_90 : f32 to vector<8x1xf32>
    %349 = arith.subf %348, %345 : vector<8x1xf32>
    %350 = vector.broadcast %349 : vector<8x1xf32> to vector<8x32xf32>
    %351 = arith.mulf %350, %333 : vector<8x32xf32>
    %352 = arith.addf %347, %351 : vector<8x32xf32>
    %c10_91 = arith.constant 10 : index
    %c0_92 = arith.constant 0 : index
    %353 = vector.load %arg6[%c10_91, %c0_92] : memref<32x128xf32, #tpu.memory_space<vmem>>, vector<1x32xf32>
    %c11_93 = arith.constant 11 : index
    %c0_94 = arith.constant 0 : index
    %354 = vector.load %arg6[%c11_93, %c0_94] : memref<32x128xf32, #tpu.memory_space<vmem>>, vector<1x32xf32>
    %cst_95 = arith.constant 0.000000e+00 : f32
    %355 = vector.broadcast %cst_95 : f32 to vector<8x32xf32>
    %356 = arith.maximumf %352, %355 : vector<8x32xf32>
    %cst_96 = arith.constant dense<0.000000e+00> : vector<8xf32>
    %357 = vector.multi_reduction <add>, %356, %cst_96 [1] : vector<8x32xf32> to vector<8xf32>
    %358 = vector.shape_cast %357 : vector<8xf32> to vector<8x1xf32>
    %cst_97 = arith.constant 3.200000e+01 : f32
    %359 = vector.broadcast %cst_97 : f32 to vector<8x1xf32>
    %360 = arith.divf %358, %359 : vector<8x1xf32>
    %361 = vector.broadcast %360 : vector<8x1xf32> to vector<8x32xf32>
    %362 = arith.subf %356, %361 : vector<8x32xf32>
    %363 = arith.mulf %362, %362 : vector<8x32xf32>
    %cst_98 = arith.constant dense<0.000000e+00> : vector<8xf32>
    %364 = vector.multi_reduction <add>, %363, %cst_98 [1] : vector<8x32xf32> to vector<8xf32>
    %365 = vector.shape_cast %364 : vector<8xf32> to vector<8x1xf32>
    %cst_99 = arith.constant 3.200000e+01 : f32
    %366 = vector.broadcast %cst_99 : f32 to vector<8x1xf32>
    %367 = arith.divf %365, %366 : vector<8x1xf32>
    %368 = vector.broadcast %360 : vector<8x1xf32> to vector<8x32xf32>
    %369 = arith.subf %356, %368 : vector<8x32xf32>
    %cst_100 = arith.constant 9.99999974E-6 : f32
    %370 = vector.broadcast %cst_100 : f32 to vector<8x1xf32>
    %371 = arith.addf %367, %370 : vector<8x1xf32>
    %372 = math.rsqrt %371 : vector<8x1xf32>
    %373 = vector.broadcast %372 : vector<8x1xf32> to vector<8x32xf32>
    %374 = arith.mulf %369, %373 : vector<8x32xf32>
    %375 = vector.broadcast %353 : vector<1x32xf32> to vector<8x32xf32>
    %376 = arith.mulf %374, %375 : vector<8x32xf32>
    %377 = vector.broadcast %354 : vector<1x32xf32> to vector<8x32xf32>
    %378 = arith.addf %376, %377 : vector<8x32xf32>
    %c40 = arith.constant 40 : index
    %c0_101 = arith.constant 0 : index
    %379 = vector.load %arg4[%c40, %c0_101] : memref<232x128xf32, #tpu.memory_space<vmem>>, vector<32x128xf32>
    %c12_102 = arith.constant 12 : index
    %c0_103 = arith.constant 0 : index
    %380 = vector.load %arg6[%c12_102, %c0_103] : memref<32x128xf32, #tpu.memory_space<vmem>>, vector<1x128xf32>
    %c13_104 = arith.constant 13 : index
    %c0_105 = arith.constant 0 : index
    %381 = vector.load %arg6[%c13_104, %c0_105] : memref<32x128xf32, #tpu.memory_space<vmem>>, vector<1x32xf32>
    %c14_106 = arith.constant 14 : index
    %c0_107 = arith.constant 0 : index
    %382 = vector.load %arg6[%c14_106, %c0_107] : memref<32x128xf32, #tpu.memory_space<vmem>>, vector<1x32xf32>
    %c15_108 = arith.constant 15 : index
    %c0_109 = arith.constant 0 : index
    %383 = vector.load %arg6[%c15_108, %c0_109] : memref<32x128xf32, #tpu.memory_space<vmem>>, vector<1x32xf32>
    %cst_110 = arith.constant dense<0.000000e+00> : vector<8x128xf32>
    %384 = tpu.matmul %378, %379, %cst_110 {dimension_numbers = #tpu.dot_dimension_numbers<[1], [0], [0], [1], [0, 0, 1, 1], [], []>} : vector<8x32xf32>, vector<32x128xf32>, vector<8x128xf32> -> vector<8x128xf32>
    %385 = vector.broadcast %380 : vector<1x128xf32> to vector<8x128xf32>
    %386 = arith.addf %384, %385 : vector<8x128xf32>
    %387 = vector.extract_strided_slice %386 {offsets = [0, 0], sizes = [8, 32], strides = [1, 1]} : vector<8x128xf32> to vector<8x32xf32>
    %388 = vector.extract_strided_slice %386 {offsets = [0, 32], sizes = [8, 32], strides = [1, 1]} : vector<8x128xf32> to vector<8x32xf32>
    %389 = vector.extract_strided_slice %386 {offsets = [0, 64], sizes = [8, 32], strides = [1, 1]} : vector<8x128xf32> to vector<8x32xf32>
    %390 = vector.extract_strided_slice %386 {offsets = [0, 96], sizes = [8, 32], strides = [1, 1]} : vector<8x128xf32> to vector<8x32xf32>
    %cst_111 = arith.constant dense<0.000000e+00> : vector<8x8xf32>
    %391 = tpu.matmul %387, %388, %cst_111 {dimension_numbers = #tpu.dot_dimension_numbers<[1], [1], [0], [0], [0, 0, 1, 0], [], []>} : vector<8x32xf32>, vector<8x32xf32>, vector<8x8xf32> -> vector<8x8xf32>
    %392 = vector.broadcast %381 : vector<1x32xf32> to vector<8x32xf32>
    %393 = arith.mulf %387, %392 : vector<8x32xf32>
    %cst_112 = arith.constant dense<0.000000e+00> : vector<8xf32>
    %394 = vector.multi_reduction <add>, %393, %cst_112 [1] : vector<8x32xf32> to vector<8xf32>
    %395 = vector.shape_cast %394 : vector<8xf32> to vector<8x1xf32>
    %396 = vector.broadcast %395 : vector<8x1xf32> to vector<8x8xf32>
    %397 = arith.mulf %195, %396 : vector<8x8xf32>
    %398 = arith.addf %391, %397 : vector<8x8xf32>
    %399 = arith.addf %398, %199 : vector<8x8xf32>
    %cst_113 = arith.constant dense<0xFF800000> : vector<8xf32>
    %400 = vector.multi_reduction <maximumf>, %399, %cst_113 [1] : vector<8x8xf32> to vector<8xf32>
    %401 = vector.shape_cast %400 : vector<8xf32> to vector<8x1xf32>
    %402 = vector.broadcast %401 : vector<8x1xf32> to vector<8x8xf32>
    %403 = arith.subf %399, %402 : vector<8x8xf32>
    %404 = math.exp %403 : vector<8x8xf32>
    %405 = arith.mulf %404, %192 : vector<8x8xf32>
    %cst_114 = arith.constant dense<0.000000e+00> : vector<8xf32>
    %406 = vector.multi_reduction <add>, %405, %cst_114 [1] : vector<8x8xf32> to vector<8xf32>
    %407 = vector.shape_cast %406 : vector<8xf32> to vector<8x1xf32>
    %cst_115 = arith.constant 0.000000e+00 : f32
    %408 = vector.broadcast %cst_115 : f32 to vector<8x1xf32>
    %409 = arith.cmpf ogt, %407, %408 : vector<8x1xf32>
    %cst_116 = arith.constant 1.000000e+00 : f32
    %410 = vector.broadcast %cst_116 : f32 to vector<8x1xf32>
    %411 = arith.select %409, %407, %410 : vector<8x1xi1>, vector<8x1xf32>
    %412 = tpu.reciprocal %411 : vector<8x1xf32> -> vector<8x1xf32>
    %413 = vector.broadcast %412 : vector<8x1xf32> to vector<8x8xf32>
    %414 = arith.mulf %405, %413 : vector<8x8xf32>
    %cst_117 = arith.constant dense<0.000000e+00> : vector<8x32xf32>
    %415 = tpu.matmul %414, %389, %cst_117 {dimension_numbers = #tpu.dot_dimension_numbers<[1], [0], [0], [1], [0, 0, 1, 1], [], []>} : vector<8x8xf32>, vector<8x32xf32>, vector<8x32xf32> -> vector<8x32xf32>
    %416 = arith.mulf %414, %195 : vector<8x8xf32>
    %cst_118 = arith.constant dense<0.000000e+00> : vector<8xf32>
    %417 = vector.multi_reduction <add>, %416, %cst_118 [1] : vector<8x8xf32> to vector<8xf32>
    %418 = vector.shape_cast %417 : vector<8xf32> to vector<8x1xf32>
    %419 = vector.broadcast %418 : vector<8x1xf32> to vector<8x32xf32>
    %420 = vector.broadcast %381 : vector<1x32xf32> to vector<8x32xf32>
    %421 = arith.mulf %419, %420 : vector<8x32xf32>
    %422 = arith.addf %415, %421 : vector<8x32xf32>
    %423 = vector.broadcast %382 : vector<1x32xf32> to vector<8x32xf32>
    %424 = arith.mulf %422, %423 : vector<8x32xf32>
    %425 = vector.broadcast %383 : vector<1x32xf32> to vector<8x32xf32>
    %426 = arith.mulf %390, %425 : vector<8x32xf32>
    %427 = arith.addf %424, %426 : vector<8x32xf32>
    %cst_119 = arith.constant dense<0.000000e+00> : vector<8xf32>
    %428 = vector.multi_reduction <add>, %427, %cst_119 [1] : vector<8x32xf32> to vector<8xf32>
    %429 = vector.shape_cast %428 : vector<8xf32> to vector<8x1xf32>
    %430 = arith.negf %429 : vector<8x1xf32>
    %431 = math.exp %430 : vector<8x1xf32>
    %cst_120 = arith.constant 1.000000e+00 : f32
    %432 = vector.broadcast %cst_120 : f32 to vector<8x1xf32>
    %433 = arith.addf %432, %431 : vector<8x1xf32>
    %434 = arith.divf %432, %433 : vector<8x1xf32>
    %435 = vector.broadcast %434 : vector<8x1xf32> to vector<8x32xf32>
    %436 = arith.mulf %435, %390 : vector<8x32xf32>
    %cst_121 = arith.constant 1.000000e+00 : f32
    %437 = vector.broadcast %cst_121 : f32 to vector<8x1xf32>
    %438 = arith.subf %437, %434 : vector<8x1xf32>
    %439 = vector.broadcast %438 : vector<8x1xf32> to vector<8x32xf32>
    %440 = arith.mulf %439, %422 : vector<8x32xf32>
    %441 = arith.addf %436, %440 : vector<8x32xf32>
    %c72 = arith.constant 72 : index
    %c0_122 = arith.constant 0 : index
    %442 = vector.load %arg4[%c72, %c0_122] : memref<232x128xf32, #tpu.memory_space<vmem>>, vector<32x8xf32>
    %c18_123 = arith.constant 18 : index
    %c0_124 = arith.constant 0 : index
    %443 = vector.load %arg6[%c18_123, %c0_124] : memref<32x128xf32, #tpu.memory_space<vmem>>, vector<1x8xf32>
    %cst_125 = arith.constant dense<0.000000e+00> : vector<8x8xf32>
    %444 = tpu.matmul %441, %442, %cst_125 {dimension_numbers = #tpu.dot_dimension_numbers<[1], [0], [0], [1], [0, 0, 1, 1], [], []>} : vector<8x32xf32>, vector<32x8xf32>, vector<8x8xf32> -> vector<8x8xf32>
    %445 = vector.broadcast %443 : vector<1x8xf32> to vector<8x8xf32>
    %446 = arith.addf %444, %445 : vector<8x8xf32>
    %c0_126 = arith.constant 0 : index
    %c0_127 = arith.constant 0 : index
    %447 = vector.load %arg5[%c0_126, %c0_127] : memref<16x512xf32, #tpu.memory_space<vmem>>, vector<8x512xf32>
    %c8_128 = arith.constant 8 : index
    %c0_129 = arith.constant 0 : index
    %448 = vector.load %arg5[%c8_128, %c0_129] : memref<16x512xf32, #tpu.memory_space<vmem>>, vector<8x512xf32>
    %cst_130 = arith.constant dense<0.000000e+00> : vector<8x512xf32>
    %449 = tpu.matmul %200, %447, %cst_130 {dimension_numbers = #tpu.dot_dimension_numbers<[1], [0], [0], [1], [0, 0, 1, 1], [], []>} : vector<8x8xf32>, vector<8x512xf32>, vector<8x512xf32> -> vector<8x512xf32>
    %cst_131 = arith.constant dense<0.000000e+00> : vector<8x512xf32>
    %450 = tpu.matmul %446, %448, %cst_131 {dimension_numbers = #tpu.dot_dimension_numbers<[1], [0], [0], [1], [0, 0, 1, 1], [], []>} : vector<8x8xf32>, vector<8x512xf32>, vector<8x512xf32> -> vector<8x512xf32>
    %451 = arith.addf %449, %450 : vector<8x512xf32>
    %452 = tpu.iota {dimensions = array<i32: 0>} : vector<8x8xi32>
    %453 = tpu.iota {dimensions = array<i32: 1>} : vector<8x8xi32>
    %c19_132 = arith.constant 19 : index
    %c0_133 = arith.constant 0 : index
    %454 = vector.load %arg6[%c19_132, %c0_133] : memref<32x128xf32, #tpu.memory_space<vmem>>, vector<1x128xf32>
    %cst_134 = arith.constant 0.000000e+00 : f32
    %455 = vector.broadcast %cst_134 : f32 to vector<8x8xf32>
    %c0_i32 = arith.constant 0 : i32
    %456 = vector.broadcast %c0_i32 : i32 to vector<8x8xi32>
    %457 = arith.cmpi eq, %452, %456 : vector<8x8xi32>
    %c0_135 = arith.constant 0 : index
    %458 = memref.load %arg3[%c0_135] : memref<16xi32, #tpu.memory_space<smem>>
    %459 = vector.broadcast %458 : i32 to vector<8x8xi32>
    %460 = arith.cmpi eq, %453, %459 : vector<8x8xi32>
    %461 = arith.andi %457, %460 : vector<8x8xi1>
    %cst_136 = arith.constant 1.000000e+00 : f32
    %462 = vector.broadcast %cst_136 : f32 to vector<8x8xf32>
    %463 = arith.select %461, %462, %455 : vector<8x8xi1>, vector<8x8xf32>
    %c1_i32 = arith.constant 1 : i32
    %464 = vector.broadcast %c1_i32 : i32 to vector<8x8xi32>
    %465 = arith.cmpi eq, %452, %464 : vector<8x8xi32>
    %c1_137 = arith.constant 1 : index
    %466 = memref.load %arg3[%c1_137] : memref<16xi32, #tpu.memory_space<smem>>
    %467 = vector.broadcast %466 : i32 to vector<8x8xi32>
    %468 = arith.cmpi eq, %453, %467 : vector<8x8xi32>
    %469 = arith.andi %465, %468 : vector<8x8xi1>
    %cst_138 = arith.constant 1.000000e+00 : f32
    %470 = vector.broadcast %cst_138 : f32 to vector<8x8xf32>
    %471 = arith.select %469, %470, %463 : vector<8x8xi1>, vector<8x8xf32>
    %c2_i32 = arith.constant 2 : i32
    %472 = vector.broadcast %c2_i32 : i32 to vector<8x8xi32>
    %473 = arith.cmpi eq, %452, %472 : vector<8x8xi32>
    %c2_139 = arith.constant 2 : index
    %474 = memref.load %arg3[%c2_139] : memref<16xi32, #tpu.memory_space<smem>>
    %475 = vector.broadcast %474 : i32 to vector<8x8xi32>
    %476 = arith.cmpi eq, %453, %475 : vector<8x8xi32>
    %477 = arith.andi %473, %476 : vector<8x8xi1>
    %cst_140 = arith.constant 1.000000e+00 : f32
    %478 = vector.broadcast %cst_140 : f32 to vector<8x8xf32>
    %479 = arith.select %477, %478, %471 : vector<8x8xi1>, vector<8x8xf32>
    %c3_i32 = arith.constant 3 : i32
    %480 = vector.broadcast %c3_i32 : i32 to vector<8x8xi32>
    %481 = arith.cmpi eq, %452, %480 : vector<8x8xi32>
    %c3_141 = arith.constant 3 : index
    %482 = memref.load %arg3[%c3_141] : memref<16xi32, #tpu.memory_space<smem>>
    %483 = vector.broadcast %482 : i32 to vector<8x8xi32>
    %484 = arith.cmpi eq, %453, %483 : vector<8x8xi32>
    %485 = arith.andi %481, %484 : vector<8x8xi1>
    %cst_142 = arith.constant 1.000000e+00 : f32
    %486 = vector.broadcast %cst_142 : f32 to vector<8x8xf32>
    %487 = arith.select %485, %486, %479 : vector<8x8xi1>, vector<8x8xf32>
    %488 = vector.extract_strided_slice %451 {offsets = [0, 0], sizes = [8, 128], strides = [1, 1]} : vector<8x512xf32> to vector<8x128xf32>
    %cst_143 = arith.constant dense<0.000000e+00> : vector<8x128xf32>
    %489 = tpu.matmul %487, %488, %cst_143 {dimension_numbers = #tpu.dot_dimension_numbers<[1], [0], [0], [1], [0, 0, 1, 1], [], []>} : vector<8x8xf32>, vector<8x128xf32>, vector<8x128xf32> -> vector<8x128xf32>
    %490 = vector.broadcast %454 : vector<1x128xf32> to vector<8x128xf32>
    %491 = arith.addf %490, %489 : vector<8x128xf32>
    %cst_144 = arith.constant 0.000000e+00 : f32
    %492 = vector.broadcast %cst_144 : f32 to vector<8x8xf32>
    %c0_i32_145 = arith.constant 0 : i32
    %493 = vector.broadcast %c0_i32_145 : i32 to vector<8x8xi32>
    %494 = arith.cmpi eq, %452, %493 : vector<8x8xi32>
    %c4_146 = arith.constant 4 : index
    %495 = memref.load %arg3[%c4_146] : memref<16xi32, #tpu.memory_space<smem>>
    %496 = vector.broadcast %495 : i32 to vector<8x8xi32>
    %497 = arith.cmpi eq, %453, %496 : vector<8x8xi32>
    %498 = arith.andi %494, %497 : vector<8x8xi1>
    %cst_147 = arith.constant 1.000000e+00 : f32
    %499 = vector.broadcast %cst_147 : f32 to vector<8x8xf32>
    %500 = arith.select %498, %499, %492 : vector<8x8xi1>, vector<8x8xf32>
    %c1_i32_148 = arith.constant 1 : i32
    %501 = vector.broadcast %c1_i32_148 : i32 to vector<8x8xi32>
    %502 = arith.cmpi eq, %452, %501 : vector<8x8xi32>
    %c5_149 = arith.constant 5 : index
    %503 = memref.load %arg3[%c5_149] : memref<16xi32, #tpu.memory_space<smem>>
    %504 = vector.broadcast %503 : i32 to vector<8x8xi32>
    %505 = arith.cmpi eq, %453, %504 : vector<8x8xi32>
    %506 = arith.andi %502, %505 : vector<8x8xi1>
    %cst_150 = arith.constant 1.000000e+00 : f32
    %507 = vector.broadcast %cst_150 : f32 to vector<8x8xf32>
    %508 = arith.select %506, %507, %500 : vector<8x8xi1>, vector<8x8xf32>
    %c2_i32_151 = arith.constant 2 : i32
    %509 = vector.broadcast %c2_i32_151 : i32 to vector<8x8xi32>
    %510 = arith.cmpi eq, %452, %509 : vector<8x8xi32>
    %c6_152 = arith.constant 6 : index
    %511 = memref.load %arg3[%c6_152] : memref<16xi32, #tpu.memory_space<smem>>
    %512 = vector.broadcast %511 : i32 to vector<8x8xi32>
    %513 = arith.cmpi eq, %453, %512 : vector<8x8xi32>
    %514 = arith.andi %510, %513 : vector<8x8xi1>
    %cst_153 = arith.constant 1.000000e+00 : f32
    %515 = vector.broadcast %cst_153 : f32 to vector<8x8xf32>
    %516 = arith.select %514, %515, %508 : vector<8x8xi1>, vector<8x8xf32>
    %c3_i32_154 = arith.constant 3 : i32
    %517 = vector.broadcast %c3_i32_154 : i32 to vector<8x8xi32>
    %518 = arith.cmpi eq, %452, %517 : vector<8x8xi32>
    %c7_155 = arith.constant 7 : index
    %519 = memref.load %arg3[%c7_155] : memref<16xi32, #tpu.memory_space<smem>>
    %520 = vector.broadcast %519 : i32 to vector<8x8xi32>
    %521 = arith.cmpi eq, %453, %520 : vector<8x8xi32>
    %522 = arith.andi %518, %521 : vector<8x8xi1>
    %cst_156 = arith.constant 1.000000e+00 : f32
    %523 = vector.broadcast %cst_156 : f32 to vector<8x8xf32>
    %524 = arith.select %522, %523, %516 : vector<8x8xi1>, vector<8x8xf32>
    %525 = vector.extract_strided_slice %451 {offsets = [0, 128], sizes = [8, 128], strides = [1, 1]} : vector<8x512xf32> to vector<8x128xf32>
    %cst_157 = arith.constant dense<0.000000e+00> : vector<8x128xf32>
    %526 = tpu.matmul %524, %525, %cst_157 {dimension_numbers = #tpu.dot_dimension_numbers<[1], [0], [0], [1], [0, 0, 1, 1], [], []>} : vector<8x8xf32>, vector<8x128xf32>, vector<8x128xf32> -> vector<8x128xf32>
    %527 = arith.addf %491, %526 : vector<8x128xf32>
    %cst_158 = arith.constant 0.000000e+00 : f32
    %528 = vector.broadcast %cst_158 : f32 to vector<8x8xf32>
    %c0_i32_159 = arith.constant 0 : i32
    %529 = vector.broadcast %c0_i32_159 : i32 to vector<8x8xi32>
    %530 = arith.cmpi eq, %452, %529 : vector<8x8xi32>
    %c8_160 = arith.constant 8 : index
    %531 = memref.load %arg3[%c8_160] : memref<16xi32, #tpu.memory_space<smem>>
    %532 = vector.broadcast %531 : i32 to vector<8x8xi32>
    %533 = arith.cmpi eq, %453, %532 : vector<8x8xi32>
    %534 = arith.andi %530, %533 : vector<8x8xi1>
    %cst_161 = arith.constant 1.000000e+00 : f32
    %535 = vector.broadcast %cst_161 : f32 to vector<8x8xf32>
    %536 = arith.select %534, %535, %528 : vector<8x8xi1>, vector<8x8xf32>
    %c1_i32_162 = arith.constant 1 : i32
    %537 = vector.broadcast %c1_i32_162 : i32 to vector<8x8xi32>
    %538 = arith.cmpi eq, %452, %537 : vector<8x8xi32>
    %c9_163 = arith.constant 9 : index
    %539 = memref.load %arg3[%c9_163] : memref<16xi32, #tpu.memory_space<smem>>
    %540 = vector.broadcast %539 : i32 to vector<8x8xi32>
    %541 = arith.cmpi eq, %453, %540 : vector<8x8xi32>
    %542 = arith.andi %538, %541 : vector<8x8xi1>
    %cst_164 = arith.constant 1.000000e+00 : f32
    %543 = vector.broadcast %cst_164 : f32 to vector<8x8xf32>
    %544 = arith.select %542, %543, %536 : vector<8x8xi1>, vector<8x8xf32>
    %c2_i32_165 = arith.constant 2 : i32
    %545 = vector.broadcast %c2_i32_165 : i32 to vector<8x8xi32>
    %546 = arith.cmpi eq, %452, %545 : vector<8x8xi32>
    %c10_166 = arith.constant 10 : index
    %547 = memref.load %arg3[%c10_166] : memref<16xi32, #tpu.memory_space<smem>>
    %548 = vector.broadcast %547 : i32 to vector<8x8xi32>
    %549 = arith.cmpi eq, %453, %548 : vector<8x8xi32>
    %550 = arith.andi %546, %549 : vector<8x8xi1>
    %cst_167 = arith.constant 1.000000e+00 : f32
    %551 = vector.broadcast %cst_167 : f32 to vector<8x8xf32>
    %552 = arith.select %550, %551, %544 : vector<8x8xi1>, vector<8x8xf32>
    %c3_i32_168 = arith.constant 3 : i32
    %553 = vector.broadcast %c3_i32_168 : i32 to vector<8x8xi32>
    %554 = arith.cmpi eq, %452, %553 : vector<8x8xi32>
    %c11_169 = arith.constant 11 : index
    %555 = memref.load %arg3[%c11_169] : memref<16xi32, #tpu.memory_space<smem>>
    %556 = vector.broadcast %555 : i32 to vector<8x8xi32>
    %557 = arith.cmpi eq, %453, %556 : vector<8x8xi32>
    %558 = arith.andi %554, %557 : vector<8x8xi1>
    %cst_170 = arith.constant 1.000000e+00 : f32
    %559 = vector.broadcast %cst_170 : f32 to vector<8x8xf32>
    %560 = arith.select %558, %559, %552 : vector<8x8xi1>, vector<8x8xf32>
    %561 = vector.extract_strided_slice %451 {offsets = [0, 256], sizes = [8, 128], strides = [1, 1]} : vector<8x512xf32> to vector<8x128xf32>
    %cst_171 = arith.constant dense<0.000000e+00> : vector<8x128xf32>
    %562 = tpu.matmul %560, %561, %cst_171 {dimension_numbers = #tpu.dot_dimension_numbers<[1], [0], [0], [1], [0, 0, 1, 1], [], []>} : vector<8x8xf32>, vector<8x128xf32>, vector<8x128xf32> -> vector<8x128xf32>
    %563 = arith.addf %527, %562 : vector<8x128xf32>
    %cst_172 = arith.constant 0.000000e+00 : f32
    %564 = vector.broadcast %cst_172 : f32 to vector<8x8xf32>
    %c0_i32_173 = arith.constant 0 : i32
    %565 = vector.broadcast %c0_i32_173 : i32 to vector<8x8xi32>
    %566 = arith.cmpi eq, %452, %565 : vector<8x8xi32>
    %c12_174 = arith.constant 12 : index
    %567 = memref.load %arg3[%c12_174] : memref<16xi32, #tpu.memory_space<smem>>
    %568 = vector.broadcast %567 : i32 to vector<8x8xi32>
    %569 = arith.cmpi eq, %453, %568 : vector<8x8xi32>
    %570 = arith.andi %566, %569 : vector<8x8xi1>
    %cst_175 = arith.constant 1.000000e+00 : f32
    %571 = vector.broadcast %cst_175 : f32 to vector<8x8xf32>
    %572 = arith.select %570, %571, %564 : vector<8x8xi1>, vector<8x8xf32>
    %c1_i32_176 = arith.constant 1 : i32
    %573 = vector.broadcast %c1_i32_176 : i32 to vector<8x8xi32>
    %574 = arith.cmpi eq, %452, %573 : vector<8x8xi32>
    %c13_177 = arith.constant 13 : index
    %575 = memref.load %arg3[%c13_177] : memref<16xi32, #tpu.memory_space<smem>>
    %576 = vector.broadcast %575 : i32 to vector<8x8xi32>
    %577 = arith.cmpi eq, %453, %576 : vector<8x8xi32>
    %578 = arith.andi %574, %577 : vector<8x8xi1>
    %cst_178 = arith.constant 1.000000e+00 : f32
    %579 = vector.broadcast %cst_178 : f32 to vector<8x8xf32>
    %580 = arith.select %578, %579, %572 : vector<8x8xi1>, vector<8x8xf32>
    %c2_i32_179 = arith.constant 2 : i32
    %581 = vector.broadcast %c2_i32_179 : i32 to vector<8x8xi32>
    %582 = arith.cmpi eq, %452, %581 : vector<8x8xi32>
    %c14_180 = arith.constant 14 : index
    %583 = memref.load %arg3[%c14_180] : memref<16xi32, #tpu.memory_space<smem>>
    %584 = vector.broadcast %583 : i32 to vector<8x8xi32>
    %585 = arith.cmpi eq, %453, %584 : vector<8x8xi32>
    %586 = arith.andi %582, %585 : vector<8x8xi1>
    %cst_181 = arith.constant 1.000000e+00 : f32
    %587 = vector.broadcast %cst_181 : f32 to vector<8x8xf32>
    %588 = arith.select %586, %587, %580 : vector<8x8xi1>, vector<8x8xf32>
    %c3_i32_182 = arith.constant 3 : i32
    %589 = vector.broadcast %c3_i32_182 : i32 to vector<8x8xi32>
    %590 = arith.cmpi eq, %452, %589 : vector<8x8xi32>
    %c15_183 = arith.constant 15 : index
    %591 = memref.load %arg3[%c15_183] : memref<16xi32, #tpu.memory_space<smem>>
    %592 = vector.broadcast %591 : i32 to vector<8x8xi32>
    %593 = arith.cmpi eq, %453, %592 : vector<8x8xi32>
    %594 = arith.andi %590, %593 : vector<8x8xi1>
    %cst_184 = arith.constant 1.000000e+00 : f32
    %595 = vector.broadcast %cst_184 : f32 to vector<8x8xf32>
    %596 = arith.select %594, %595, %588 : vector<8x8xi1>, vector<8x8xf32>
    %597 = vector.extract_strided_slice %451 {offsets = [0, 384], sizes = [8, 128], strides = [1, 1]} : vector<8x512xf32> to vector<8x128xf32>
    %cst_185 = arith.constant dense<0.000000e+00> : vector<8x128xf32>
    %598 = tpu.matmul %596, %597, %cst_185 {dimension_numbers = #tpu.dot_dimension_numbers<[1], [0], [0], [1], [0, 0, 1, 1], [], []>} : vector<8x8xf32>, vector<8x128xf32>, vector<8x128xf32> -> vector<8x128xf32>
    %599 = arith.addf %563, %598 : vector<8x128xf32>
    %cst_186 = arith.constant 0.000000e+00 : f32
    %600 = vector.broadcast %cst_186 : f32 to vector<8x128xf32>
    %601 = arith.maximumf %599, %600 : vector<8x128xf32>
    %cst_187 = arith.constant dense<0.000000e+00> : vector<8xf32>
    %602 = vector.multi_reduction <add>, %601, %cst_187 [1] : vector<8x128xf32> to vector<8xf32>
    %603 = vector.shape_cast %602 : vector<8xf32> to vector<8x1xf32>
    %cst_188 = arith.constant 1.280000e+02 : f32
    %604 = vector.broadcast %cst_188 : f32 to vector<8x1xf32>
    %605 = arith.divf %603, %604 : vector<8x1xf32>
    %606 = vector.broadcast %605 : vector<8x1xf32> to vector<8x128xf32>
    %607 = arith.subf %601, %606 : vector<8x128xf32>
    %608 = arith.mulf %607, %607 : vector<8x128xf32>
    %cst_189 = arith.constant dense<0.000000e+00> : vector<8xf32>
    %609 = vector.multi_reduction <add>, %608, %cst_189 [1] : vector<8x128xf32> to vector<8xf32>
    %610 = vector.shape_cast %609 : vector<8xf32> to vector<8x1xf32>
    %cst_190 = arith.constant 1.280000e+02 : f32
    %611 = vector.broadcast %cst_190 : f32 to vector<8x1xf32>
    %612 = arith.divf %610, %611 : vector<8x1xf32>
    %613 = vector.broadcast %605 : vector<8x1xf32> to vector<8x128xf32>
    %614 = arith.subf %601, %613 : vector<8x128xf32>
    %cst_191 = arith.constant 9.99999974E-6 : f32
    %615 = vector.broadcast %cst_191 : f32 to vector<8x1xf32>
    %616 = arith.addf %612, %615 : vector<8x1xf32>
    %617 = math.rsqrt %616 : vector<8x1xf32>
    %618 = vector.broadcast %617 : vector<8x1xf32> to vector<8x128xf32>
    %619 = arith.mulf %614, %618 : vector<8x128xf32>
    %c20_192 = arith.constant 20 : index
    %c0_193 = arith.constant 0 : index
    %620 = vector.load %arg6[%c20_192, %c0_193] : memref<32x128xf32, #tpu.memory_space<vmem>>, vector<1x128xf32>
    %621 = vector.broadcast %620 : vector<1x128xf32> to vector<8x128xf32>
    %622 = arith.mulf %619, %621 : vector<8x128xf32>
    %c21_194 = arith.constant 21 : index
    %c0_195 = arith.constant 0 : index
    %623 = vector.load %arg6[%c21_194, %c0_195] : memref<32x128xf32, #tpu.memory_space<vmem>>, vector<1x128xf32>
    %624 = vector.broadcast %623 : vector<1x128xf32> to vector<8x128xf32>
    %625 = arith.addf %622, %624 : vector<8x128xf32>
    %c104 = arith.constant 104 : index
    %c0_196 = arith.constant 0 : index
    %626 = vector.load %arg4[%c104, %c0_196] : memref<232x128xf32, #tpu.memory_space<vmem>>, vector<128x128xf32>
    %cst_197 = arith.constant dense<0.000000e+00> : vector<8x128xf32>
    %627 = tpu.matmul %625, %626, %cst_197 {dimension_numbers = #tpu.dot_dimension_numbers<[1], [0], [0], [1], [0, 0, 1, 1], [], []>} : vector<8x128xf32>, vector<128x128xf32>, vector<8x128xf32> -> vector<8x128xf32>
    %c22_198 = arith.constant 22 : index
    %c0_199 = arith.constant 0 : index
    %628 = vector.load %arg6[%c22_198, %c0_199] : memref<32x128xf32, #tpu.memory_space<vmem>>, vector<1x128xf32>
    %629 = vector.broadcast %628 : vector<1x128xf32> to vector<8x128xf32>
    %630 = arith.addf %627, %629 : vector<8x128xf32>
    %cst_200 = arith.constant 0.000000e+00 : f32
    %631 = vector.broadcast %cst_200 : f32 to vector<8x128xf32>
    %632 = arith.maximumf %630, %631 : vector<8x128xf32>
    %c23_201 = arith.constant 23 : index
    %c0_202 = arith.constant 0 : index
    %633 = vector.load %arg6[%c23_201, %c0_202] : memref<32x128xf32, #tpu.memory_space<vmem>>, vector<1x128xf32>
    %634 = vector.broadcast %633 : vector<1x128xf32> to vector<8x128xf32>
    %635 = arith.mulf %632, %634 : vector<8x128xf32>
    %cst_203 = arith.constant dense<0.000000e+00> : vector<8xf32>
    %636 = vector.multi_reduction <add>, %635, %cst_203 [1] : vector<8x128xf32> to vector<8xf32>
    %637 = vector.shape_cast %636 : vector<8xf32> to vector<8x1xf32>
    %c24_204 = arith.constant 24 : index
    %c0_205 = arith.constant 0 : index
    %638 = vector.load %arg6[%c24_204, %c0_205] : memref<32x128xf32, #tpu.memory_space<vmem>>, vector<1x1xf32>
    %639 = vector.broadcast %638 : vector<1x1xf32> to vector<8x1xf32>
    %640 = arith.addf %637, %639 : vector<8x1xf32>
    %641 = vector.shape_cast %640 : vector<8x1xf32> to vector<8x1xf32>
    %642 = vector.broadcast %641 : vector<8x1xf32> to vector<8x128xf32>
    %c0_206 = arith.constant 0 : index
    %c0_207 = arith.constant 0 : index
    %643 = vector.load %arg7[%c0_206, %c0_207] : memref<8x128xf32, #tpu.memory_space<vmem>>, vector<8x128xf32>
    tpu.vector_store %arg7[%c0_206, %c0_207], %642 {strides = array<i32>} : memref<8x128xf32, #tpu.memory_space<vmem>>, vector<8x128xf32>,
    return
  }
}

</mosaic_0001>

<llo_original>
// kernel: gttp_forward.1
$region0: #{gttp_forward.1}
  #allocation0 [shape = 'u32[]', space=smem, size = 0x4, offset = 0x4, fixed_abs, tag = 'smem constant byte address 0x4 - core index']
  #allocation1 [shape = 'u32[72,128]{1,0:T(1,128)}', space=vmem, size = 0x9000, scoped, tag = 'internal scratch']
  %s0 = inlined_call_operand.hbm [shape: f32[8,8], index: 0, kind: input, shape index: {}]
  %s1 = inlined_call_operand.vmem [shape: s32[32], index: 1, kind: input, shape index: {}]
  %s2 = inlined_call_operand.vmem [shape: f32[16], index: 2, kind: input, shape index: {}]
  %s3 = inlined_call_operand.vmem [shape: s32[16], index: 3, kind: input, shape index: {}]
  %s4 = inlined_call_operand.hbm [shape: f32[232,128], index: 4, kind: input, shape index: {}]
  %s5 = inlined_call_operand.hbm [shape: f32[16,512], index: 5, kind: input, shape index: {}]
  %s6 = inlined_call_operand.hbm [shape: f32[32,128], index: 6, kind: input, shape index: {}]
  %s7 = inlined_call_operand.vmem [shape: f32[8,128], index: 7, kind: output, shape index: {}]
  %s8 = sld [smem:[#allocation0]]
  $region66: #{gttp_forward.1} parent=0
    _
  %s10 = ssub.s32 1, %s8
  %s11 = scalar_select 0, %s10, %s8
  $region1: #{gttp_forward.1} parent=0
    #allocation2 [shape = 'u8[4096]{0}', space=vmem, size = 0x1000, scoped, tag = 'input window, operand 0, single buffered']
    #allocation3 [shape = 's32[1]{0}', space=sflag, size = 0x4, scoped, tag = 'scoped memory for gttp_forward.1']
    #allocation4 [shape = 's32[1]{0}', space=sflag, size = 0x4, scoped, tag = 'scoped memory for gttp_forward.1']
    #allocation5 [shape = 'u8[512]{0}', space=smem, size = 0x200, scoped, tag = 'input window, operand 1, single buffered']
    #allocation6 [shape = 'u8[512]{0}', space=smem, size = 0x200, scoped, tag = 'input window, operand 2, single buffered']
    #allocation7 [shape = 's32[1]{0}', space=sflag, size = 0x4, scoped, tag = 'scoped memory for gttp_forward.1']
    #allocation8 [shape = 'u8[512]{0}', space=smem, size = 0x200, scoped, tag = 'input window, operand 3, single buffered']
    #allocation9 [shape = 'u8[118784]{0}', space=vmem, size = 0x1d000, scoped, tag = 'input window, operand 4, single buffered']
    #allocation10 [shape = 's32[1]{0}', space=sflag, size = 0x4, scoped, tag = 'scoped memory for gttp_forward.1']
    #allocation11 [shape = 'u8[32768]{0}', space=vmem, size = 0x8000, scoped, tag = 'input window, operand 5, single buffered']
    #allocation12 [shape = 'u8[16384]{0}', space=vmem, size = 0x4000, scoped, tag = 'input window, operand 6, single buffered']
    #allocation13 [shape = 's32[1]{0}', space=sflag, size = 0x4, scoped, tag = 'scoped memory for gttp_forward.1']
    %12 = vsyncpa [#allocation3], 0
    %13 = vsyncpa [#allocation4], 0
    %14 = vsyncpa [#allocation7], 0
    %15 = vsyncpa [#allocation10], 0
    %16 = vsyncpa [#allocation13], 0
    // Predicated region
    $region2: #{gttp_forward.1} parent=1 // pred_check
      _
    $region3: #{gttp_forward.1} parent=1 // pred_check_branch
      %18 = sbr.rel (0) target = $region5
    $region4: #{gttp_forward.1} parent=1 // pred_region
      %20 = vsyncadd [#allocation3], 0
      %s22 = sshll.u32 %s0, 4
      %s23 = int_to_ptr.hbm [resolvable:$true] %s22
      %s24 = sshll.u32 [#allocation2], 4
      %s25 = int_to_ptr.vmem [resolvable:$true] %s24
      %27 = dma.hbm_to_vmem [thread:$0]  %s23, 128, %s25, [#allocation3]
    $region5: #{gttp_forward.1} parent=1 // pred_fallthru
      _
    // Predicated region
    $region6: #{gttp_forward.1} parent=1 // pred_check
      _
    $region7: #{gttp_forward.1} parent=1 // pred_check_branch
      %29 = sbr.rel (0) target = $region9
    $region8: #{gttp_forward.1} parent=1 // pred_region
      %31 = vsyncadd [#allocation4], 0
      %s33 = sshll.u32 %s1, 4
      %s34 = int_to_ptr.vmem [resolvable:$true] %s33
      %36 = dma.vmem_to_smem %s34, 16, [#allocation5], [#allocation4]
    $region9: #{gttp_forward.1} parent=1 // pred_fallthru
      _
    // Predicated region
    $region10: #{gttp_forward.1} parent=1 // pred_check
      _
    $region11: #{gttp_forward.1} parent=1 // pred_check_branch
      %38 = sbr.rel (0) target = $region13
    $region12: #{gttp_forward.1} parent=1 // pred_region
      %40 = vsyncadd [#allocation7], 0
      %s42 = sshll.u32 %s2, 4
      %s43 = int_to_ptr.vmem [resolvable:$true] %s42
      %45 = dma.vmem_to_smem %s43, 16, [#allocation6], [#allocation7]
    $region13: #{gttp_forward.1} parent=1 // pred_fallthru
      _
    // Predicated region
    $region14: #{gttp_forward.1} parent=1 // pred_check
      _
    $region15: #{gttp_forward.1} parent=1 // pred_check_branch
      %47 = sbr.rel (0) target = $region17
    $region16: #{gttp_forward.1} parent=1 // pred_region
      %49 = vsyncadd [#allocation7], 0
      %s51 = sshll.u32 %s3, 4
      %s52 = int_to_ptr.vmem [resolvable:$true] %s51
      %54 = dma.vmem_to_smem %s52, 16, [#allocation8], [#allocation7]
    $region17: #{gttp_forward.1} parent=1 // pred_fallthru
      _
    // Predicated region
    $region18: #{gttp_forward.1} parent=1 // pred_check
      _
    $region19: #{gttp_forward.1} parent=1 // pred_check_branch
      %56 = sbr.rel (0) target = $region21
    $region20: #{gttp_forward.1} parent=1 // pred_region
      %58 = vsyncadd [#allocation10], 0
      %s59 = sshll.u32 %s4, 4
      %s60 = int_to_ptr.hbm [resolvable:$true] %s59
      %s61 = sshll.u32 [#allocation9], 4
      %s62 = int_to_ptr.vmem [resolvable:$true] %s61
      %67 = dma.hbm_to_vmem [thread:$0]  %s60, 3712, %s62, [#allocation10], 128, 128, 8
    $region21: #{gttp_forward.1} parent=1 // pred_fallthru
      _
    // Predicated region
    $region22: #{gttp_forward.1} parent=1 // pred_check
      _
    $region23: #{gttp_forward.1} parent=1 // pred_check_branch
      %69 = sbr.rel (0) target = $region25
    $region24: #{gttp_forward.1} parent=1 // pred_region
      %71 = vsyncadd [#allocation10], 0
      %s72 = sshll.u32 %s5, 4
      %s73 = int_to_ptr.hbm [resolvable:$true] %s72
      %s74 = sshll.u32 [#allocation11], 4
      %s75 = int_to_ptr.vmem [resolvable:$true] %s74
      %80 = dma.hbm_to_vmem [thread:$0]  %s73, 1024, %s75, [#allocation10], 512, 512, 32
    $region25: #{gttp_forward.1} parent=1 // pred_fallthru
      _
    // Predicated region
    $region26: #{gttp_forward.1} parent=1 // pred_check
      _
    $region27: #{gttp_forward.1} parent=1 // pred_check_branch
      %82 = sbr.rel (0) target = $region29
    $region28: #{gttp_forward.1} parent=1 // pred_region
      %84 = vsyncadd [#allocation13], 0
      %s85 = sshll.u32 %s6, 4
      %s86 = int_to_ptr.hbm [resolvable:$true] %s85
      %s87 = sshll.u32 [#allocation12], 4
      %s88 = int_to_ptr.vmem [resolvable:$true] %s87
      %93 = dma.hbm_to_vmem [thread:$0]  %s86, 512, %s88, [#allocation13], 128, 128, 8
    $region29: #{gttp_forward.1} parent=1 // pred_fallthru
      _
    // Predicated region
    $region30: #{gttp_forward.1} parent=1 // pred_check
      _
    $region31: #{gttp_forward.1} parent=1 // pred_check_branch
      %95 = sbr.rel (0) target = $region33
    $region32: #{gttp_forward.1} parent=1 // pred_region
      %97 = dma.done [#allocation3], 128
    $region33: #{gttp_forward.1} parent=1 // pred_fallthru
      _
    // Predicated region
    $region34: #{gttp_forward.1} parent=1 // pred_check
      _
    $region35: #{gttp_forward.1} parent=1 // pred_check_branch
      %99 = sbr.rel (0) target = $region37
    $region36: #{gttp_forward.1} parent=1 // pred_region
      %101 = dma.done [#allocation4], 16
    $region37: #{gttp_forward.1} parent=1 // pred_fallthru
      _
    // Predicated region
    $region38: #{gttp_forward.1} parent=1 // pred_check
      _
    $region39: #{gttp_forward.1} parent=1 // pred_check_branch
      %103 = sbr.rel (0) target = $region41
    $region40: #{gttp_forward.1} parent=1 // pred_region
      %105 = dma.done [#allocation7], 16
    $region41: #{gttp_forward.1} parent=1 // pred_fallthru
      _
    // Predicated region
    $region42: #{gttp_forward.1} parent=1 // pred_check
      _
    $region43: #{gttp_forward.1} parent=1 // pred_check_branch
      %107 = sbr.rel (0) target = $region45
    $region44: #{gttp_forward.1} parent=1 // pred_region
      %109 = dma.done [#allocation7], 16
    $region45: #{gttp_forward.1} parent=1 // pred_fallthru
      _
    // Predicated region
    $region46: #{gttp_forward.1} parent=1 // pred_check
      _
    $region47: #{gttp_forward.1} parent=1 // pred_check_branch
      %111 = sbr.rel (0) target = $region49
    $region48: #{gttp_forward.1} parent=1 // pred_region
      %113 = dma.done [#allocation10], 3712
    $region49: #{gttp_forward.1} parent=1 // pred_fallthru
      _
    // Predicated region
    $region50: #{gttp_forward.1} parent=1 // pred_check
      _
    $region51: #{gttp_forward.1} parent=1 // pred_check_branch
      %115 = sbr.rel (0) target = $region53
    $region52: #{gttp_forward.1} parent=1 // pred_region
      %117 = dma.done [#allocation10], 1024
    $region53: #{gttp_forward.1} parent=1 // pred_fallthru
      _
    // Predicated region
    $region54: #{gttp_forward.1} parent=1 // pred_check
      _
    $region55: #{gttp_forward.1} parent=1 // pred_check_branch
      %119 = sbr.rel (0) target = $region57
    $region56: #{gttp_forward.1} parent=1 // pred_region
      %121 = dma.done [#allocation13], 512
    $region57: #{gttp_forward.1} parent=1 // pred_fallthru
      _
    %122 = sfence
    %v123 = vlaneseq
    %v124 = vshrl.u32 %v123, 7
    %v125 = vlaneseq
    %v126 = vand.u32 %v125, 127
    %s127 = sld [smem:[#allocation5]]
    %s128 = sld [smem:[#allocation5 + $0x10]]
    %v129 = vstv %s128
    %vm130 = vcmp.eq.s32.totalorder %v124, %v129
    %v131 = vstv %s127
    %vm132 = vcmp.eq.s32.totalorder %v126, %v131
    %vm133 = vmand %vm130, %vm132
    %v134 = vsel %vm133, 1.0, 0.0
    %s135 = sld [smem:[#allocation6]]
    %v136 = vstv %s135
    %v137 = vsel %vm133, %v136, 0.0
    %s138 = sld [smem:[#allocation5 + $0x1]]
    %s139 = sld [smem:[#allocation5 + $0x11]]
    %v140 = vstv %s139
    %vm141 = vcmp.eq.s32.totalorder %v124, %v140
    %v142 = vstv %s138
    %vm143 = vcmp.eq.s32.totalorder %v126, %v142
    %vm144 = vmand %vm141, %vm143
    %v145 = vsel %vm144, 1.0, %v134
    %s146 = sld [smem:[#allocation6 + $0x1]]
    %v147 = vstv %s146
    %v148 = vsel %vm144, %v147, %v137
    %s149 = sld [smem:[#allocation5 + $0x2]]
    %s150 = sld [smem:[#allocation5 + $0x12]]
    %v151 = vstv %s150
    %vm152 = vcmp.eq.s32.totalorder %v124, %v151
    %v153 = vstv %s149
    %vm154 = vcmp.eq.s32.totalorder %v126, %v153
    %vm155 = vmand %vm152, %vm154
    %v156 = vsel %vm155, 1.0, %v145
    %s157 = sld [smem:[#allocation6 + $0x2]]
    %v158 = vstv %s157
    %v159 = vsel %vm155, %v158, %v148
    %s160 = sld [smem:[#allocation5 + $0x3]]
    %s161 = sld [smem:[#allocation5 + $0x13]]
    %v162 = vstv %s161
    %vm163 = vcmp.eq.s32.totalorder %v124, %v162
    %v164 = vstv %s160
    %vm165 = vcmp.eq.s32.totalorder %v126, %v164
    %vm166 = vmand %vm163, %vm165
    %v167 = vsel %vm166, 1.0, %v156
    %s168 = sld [smem:[#allocation6 + $0x3]]
    %v169 = vstv %s168
    %v170 = vsel %vm166, %v169, %v159
    %s171 = sld [smem:[#allocation5 + $0x4]]
    %s172 = sld [smem:[#allocation5 + $0x14]]
    %v173 = vstv %s172
    %vm174 = vcmp.eq.s32.totalorder %v124, %v173
    %v175 = vstv %s171
    %vm176 = vcmp.eq.s32.totalorder %v126, %v175
    %vm177 = vmand %vm174, %vm176
    %v178 = vsel %vm177, 1.0, %v167
    %s179 = sld [smem:[#allocation6 + $0x4]]
    %v180 = vstv %s179
    %v181 = vsel %vm177, %v180, %v170
    %s182 = sld [smem:[#allocation5 + $0x5]]
    %s183 = sld [smem:[#allocation5 + $0x15]]
    %v184 = vstv %s183
    %vm185 = vcmp.eq.s32.totalorder %v124, %v184
    %v186 = vstv %s182
    %vm187 = vcmp.eq.s32.totalorder %v126, %v186
    %vm188 = vmand %vm185, %vm187
    %v189 = vsel %vm188, 1.0, %v178
    %s190 = sld [smem:[#allocation6 + $0x5]]
    %v191 = vstv %s190
    %v192 = vsel %vm188, %v191, %v181
    %s193 = sld [smem:[#allocation5 + $0x6]]
    %s194 = sld [smem:[#allocation5 + $0x16]]
    %v195 = vstv %s194
    %vm196 = vcmp.eq.s32.totalorder %v124, %v195
    %v197 = vstv %s193
    %vm198 = vcmp.eq.s32.totalorder %v126, %v197
    %vm199 = vmand %vm196, %vm198
    %v200 = vsel %vm199, 1.0, %v189
    %s201 = sld [smem:[#allocation6 + $0x6]]
    %v202 = vstv %s201
    %v203 = vsel %vm199, %v202, %v192
    %s204 = sld [smem:[#allocation5 + $0x7]]
    %s205 = sld [smem:[#allocation5 + $0x17]]
    %v206 = vstv %s205
    %vm207 = vcmp.eq.s32.totalorder %v124, %v206
    %v208 = vstv %s204
    %vm209 = vcmp.eq.s32.totalorder %v126, %v208
    %vm210 = vmand %vm207, %vm209
    %v211 = vsel %vm210, 1.0, %v200
    %s212 = sld [smem:[#allocation6 + $0x7]]
    %v213 = vstv %s212
    %v214 = vsel %vm210, %v213, %v203
    %s215 = sld [smem:[#allocation5 + $0x8]]
    %s216 = sld [smem:[#allocation5 + $0x18]]
    %v217 = vstv %s216
    %vm218 = vcmp.eq.s32.totalorder %v124, %v217
    %v219 = vstv %s215
    %vm220 = vcmp.eq.s32.totalorder %v126, %v219
    %vm221 = vmand %vm218, %vm220
    %v222 = vsel %vm221, 1.0, %v211
    %s223 = sld [smem:[#allocation6 + $0x8]]
    %v224 = vstv %s223
    %v225 = vsel %vm221, %v224, %v214
    %s226 = sld [smem:[#allocation5 + $0x9]]
    %s227 = sld [smem:[#allocation5 + $0x19]]
    %v228 = vstv %s227
    %vm229 = vcmp.eq.s32.totalorder %v124, %v228
    %v230 = vstv %s226
    %vm231 = vcmp.eq.s32.totalorder %v126, %v230
    %vm232 = vmand %vm229, %vm231
    %v233 = vsel %vm232, 1.0, %v222
    %s234 = sld [smem:[#allocation6 + $0x9]]
    %v235 = vstv %s234
    %v236 = vsel %vm232, %v235, %v225
    %s237 = sld [smem:[#allocation5 + $0xa]]
    %s238 = sld [smem:[#allocation5 + $0x1a]]
    %v239 = vstv %s238
    %vm240 = vcmp.eq.s32.totalorder %v124, %v239
    %v241 = vstv %s237
    %vm242 = vcmp.eq.s32.totalorder %v126, %v241
    %vm243 = vmand %vm240, %vm242
    %v244 = vsel %vm243, 1.0, %v233
    %s245 = sld [smem:[#allocation6 + $0xa]]
    %v246 = vstv %s245
    %v247 = vsel %vm243, %v246, %v236
    %s248 = sld [smem:[#allocation5 + $0xb]]
    %s249 = sld [smem:[#allocation5 + $0x1b]]
    %v250 = vstv %s249
    %vm251 = vcmp.eq.s32.totalorder %v124, %v250
    %v252 = vstv %s248
    %vm253 = vcmp.eq.s32.totalorder %v126, %v252
    %vm254 = vmand %vm251, %vm253
    %v255 = vsel %vm254, 1.0, %v244
    %s256 = sld [smem:[#allocation6 + $0xb]]
    %v257 = vstv %s256
    %v258 = vsel %vm254, %v257, %v247
    %s259 = sld [smem:[#allocation5 + $0xc]]
    %s260 = sld [smem:[#allocation5 + $0x1c]]
    %v261 = vstv %s260
    %vm262 = vcmp.eq.s32.totalorder %v124, %v261
    %v263 = vstv %s259
    %vm264 = vcmp.eq.s32.totalorder %v126, %v263
    %vm265 = vmand %vm262, %vm264
    %v266 = vsel %vm265, 1.0, %v255
    %s267 = sld [smem:[#allocation6 + $0xc]]
    %v268 = vstv %s267
    %v269 = vsel %vm265, %v268, %v258
    %s270 = sld [smem:[#allocation5 + $0xd]]
    %s271 = sld [smem:[#allocation5 + $0x1d]]
    %v272 = vstv %s271
    %vm273 = vcmp.eq.s32.totalorder %v124, %v272
    %v274 = vstv %s270
    %vm275 = vcmp.eq.s32.totalorder %v126, %v274
    %vm276 = vmand %vm273, %vm275
    %v277 = vsel %vm276, 1.0, %v266
    %s278 = sld [smem:[#allocation6 + $0xd]]
    %v279 = vstv %s278
    %v280 = vsel %vm276, %v279, %v269
    %s281 = sld [smem:[#allocation5 + $0xe]]
    %s282 = sld [smem:[#allocation5 + $0x1e]]
    %v283 = vstv %s282
    %vm284 = vcmp.eq.s32.totalorder %v124, %v283
    %v285 = vstv %s281
    %vm286 = vcmp.eq.s32.totalorder %v126, %v285
    %vm287 = vmand %vm284, %vm286
    %v288 = vsel %vm287, 1.0, %v277
    %s289 = sld [smem:[#allocation6 + $0xe]]
    %v290 = vstv %s289
    %v291 = vsel %vm287, %v290, %v280
    %s292 = sld [smem:[#allocation5 + $0xf]]
    %s293 = sld [smem:[#allocation5 + $0x1f]]
    %v294 = vstv %s293
    %vm295 = vcmp.eq.s32.totalorder %v124, %v294
    %v296 = vstv %s292
    %vm297 = vcmp.eq.s32.totalorder %v126, %v296
    %vm298 = vmand %vm295, %vm297
    %v299 = vsel %vm298, 1.0, %v288
    %s300 = sld [smem:[#allocation6 + $0xf]]
    %v301 = vstv %s300
    %v302 = vsel %vm298, %v301, %v291
    %v303 = vsub.f32 %v299, 1.0
    %v304 = vmul.f32 %v303, 1e+30
    %v305 = vld [vmem:[#allocation2] sm:$0xff]
    %v306 = vld [vmem:[#allocation9] sm:$0xff]
    %v307 = vld [vmem:[#allocation12] sm:$0x1]
    %v308 = vld [vmem:[#allocation12 + $0x1] sm:$0x1]
    %v309 = vld [vmem:[#allocation12 + $0x2] sm:$0x1]
    %v310 = vld [vmem:[#allocation12 + $0x3] sm:$0x1]
    %v311 = vperm.slane %v307, 0
    %vm312 = vcmask 64512
    %v314 = vsel %vm312, %v305, 0
    %316 = vmatpush.msra.mxu0 0.0
    %317 = vmatpush.msra.mxu0 0.0
    %318 = vmatpush.msra.mxu0 0.0
    %319 = vmatpush.msra.mxu0 0.0
    %320 = vmatpush.msra.mxu0 0.0
    %321 = vmatpush.msra.mxu0 0.0
    %322 = vmatpush.msra.mxu0 0.0
    %323 = vmatpush.msra.mxu0 0.0
    %324 = vmatpush.msra.mxu0 0.0
    %325 = vmatpush.msra.mxu0 0.0
    %326 = vmatpush.msra.mxu0 0.0
    %327 = vmatpush.msra.mxu0 0.0
    %328 = vmatpush.msra.mxu0 0.0
    %329 = vmatpush.msra.mxu0 0.0
    %330 = vmatpush.msra.mxu0 0.0
    %331 = vmatpush.msra.mxu0 %v306
    %332 = vmatmul.f32.gmra.mxu0 %v314
    %v333 = vpop.f32.mrf.mxu0
    %v334 = vadd.f32 %v311, %v333
    %335 = vdwg.mxu0
    %v336 = vperm.slane %v308, 0
    %v337 = vmul.f32 %v334, %v336
    %vm338 = vcmask 261120
    %v339 = vsel %vm338, %v337, 0.0
    %340 = vadd.xlane.f32.xlu0 %v339
    %v341 = vpop.xlane.xlu0 %340
    %v342 = vmul.f32 %v302, %v341
    %344 = vrot.lane.b32.xlu0 %v334, 96
    %v345 = vpop.permute.xlu0 %344
    %v346 = vsel %vm338, %v334, 0
    %v348 = vsel %vm338, %v345, 0
    %350 = vmatpush.xpose.msra.mxu0 0.0
    %351 = vmatpush.xpose.msra.mxu0 0.0
    %352 = vmatpush.xpose.msra.mxu0 0.0
    %353 = vmatpush.xpose.msra.mxu0 0.0
    %354 = vmatpush.xpose.msra.mxu0 0.0
    %355 = vmatpush.xpose.msra.mxu0 0.0
    %356 = vmatpush.xpose.msra.mxu0 0.0
    %357 = vmatpush.xpose.msra.mxu0 0.0
    %358 = vmatpush.xpose.msra.mxu0 0.0
    %359 = vmatpush.xpose.msra.mxu0 0.0
    %360 = vmatpush.xpose.msra.mxu0 0.0
    %361 = vmatpush.xpose.msra.mxu0 0.0
    %362 = vmatpush.xpose.msra.mxu0 0.0
    %363 = vmatpush.xpose.msra.mxu0 0.0
    %364 = vmatpush.xpose.msra.mxu0 0.0
    %365 = vmatpush.xpose.msra.mxu0 %v348
    %366 = vmatmul.f32.gmra.mxu0 %v346
    %v367 = vpop.f32.mrf.mxu0
    %v368 = vadd.f32 %v342, %v367
    %369 = vdwg.mxu0
    %v370 = vadd.f32 %v368, %v304
    %v371 = vsel %vm312, %v370, -inf
    %372 = vmax.xlane.f32.xlu0 %v371
    %v373 = vpop.xlane.xlu0 %372
    %v374 = vsub.f32 %v370, %v373
    %v375 = vmul.f32 %v374, 1.442695
    %v376 = vpow.pop %v375
    %v377 = vmul.f32 %v376, %v299
    %v378 = vsel %vm312, %v377, 0.0
    %379 = vadd.xlane.f32.xlu0 %v378
    %v380 = vpop.xlane.xlu0 %379
    %vm381 = vcmp.gt.f32.partialorder %v380, 0.0
    %v382 = vsel %vm381, %v380, 1.0
    %v383 = vrcp.pop %v382
    %v384 = vmul.f32 %v382, %v383
    %v385 = vsub.f32 1.0, %v384
    %v386 = vmul.f32 %v383, %v385
    %v387 = vadd.f32 %v383, %v386
    %vm388 = vweird.f32 %v382
    %vm389 = vweird.f32 %v383
    %vm390 = vmor %vm388, %vm389
    %v391 = vsel %vm390, %v383, %v387
    %v392 = vand.u32 2147483647, %v382
    %vm393 = vcmp.eq.f32.partialorder %v392, 8.507059e+37
    %v394 = vand.u32 %v382, 2147483648
    %v395 = vor.u32 1.1754944e-38, %v394
    %v396 = vsel %vm393, %v395, %v391
    %v397 = vmul.f32 %v377, %v396
    %v398 = vmul.f32 %v397, %v302
    %v399 = vsel %vm312, %v398, 0.0
    %400 = vadd.xlane.f32.xlu0 %v399
    %v401 = vpop.xlane.xlu0 %400
    %v402 = vmul.f32 %v401, %v336
    %403 = vrot.lane.b32.xlu0 %v334, 64
    %v404 = vpop.permute.xlu0 %403
    %v407 = vsel %vm312, %v397, 0
    %409 = vmatpush.msra.mxu0 0.0
    %410 = vmatpush.msra.mxu0 0.0
    %411 = vmatpush.msra.mxu0 0.0
    %412 = vmatpush.msra.mxu0 0.0
    %413 = vmatpush.msra.mxu0 0.0
    %414 = vmatpush.msra.mxu0 0.0
    %415 = vmatpush.msra.mxu0 0.0
    %416 = vmatpush.msra.mxu0 0.0
    %417 = vmatpush.msra.mxu0 0.0
    %418 = vmatpush.msra.mxu0 0.0
    %419 = vmatpush.msra.mxu0 0.0
    %420 = vmatpush.msra.mxu0 0.0
    %421 = vmatpush.msra.mxu0 0.0
    %422 = vmatpush.msra.mxu0 0.0
    %423 = vmatpush.msra.mxu0 0.0
    %424 = vmatpush.msra.mxu0 %v404
    %425 = vmatmul.f32.gmra.mxu0 %v407
    %v426 = vpop.f32.mrf.mxu0
    %v427 = vadd.f32 %v402, %v426
    %428 = vdwg.mxu0
    %v429 = vperm.slane %v309, 0
    %v430 = vmul.f32 %v427, %v429
    %v431 = vperm.slane %v310, 0
    %433 = vrot.lane.b32.xlu0 %v431, 96
    %v434 = vpop.permute.xlu0 %433
    %v436 = vmul.f32 %v334, %v434
    %438 = vrot.lane.b32.xlu0 %v436, 32
    %v439 = vpop.permute.xlu0 %438
    %v441 = vadd.f32 %v430, %v439
    %v442 = vsel %vm338, %v441, 0.0
    %443 = vadd.xlane.f32.xlu0 %v442
    %v444 = vpop.xlane.xlu0 %443
    %v445 = vxor.u32 %v444, 2147483648
    %v446 = vmul.f32 %v445, 1.442695
    %v447 = vpow.pop %v446
    %v448 = vadd.f32 %v447, 1.0
    %v449 = vrcp.pop %v448
    %v450 = vmul.f32 %v448, %v449
    %v451 = vsub.f32 1.0, %v450
    %v452 = vmul.f32 %v449, %v451
    %v453 = vadd.f32 %v449, %v452
    %vm454 = vweird.f32 %v448
    %vm455 = vweird.f32 %v449
    %vm456 = vmor %vm454, %vm455
    %v457 = vsel %vm456, %v449, %v453
    %v458 = vand.u32 2147483647, %v448
    %vm459 = vcmp.eq.f32.partialorder %v458, 8.507059e+37
    %v460 = vand.u32 %v448, 2147483648
    %v461 = vor.u32 1.1754944e-38, %v460
    %v462 = vsel %vm459, %v461, %v457
    %v463 = vmul.f32 1.0, %v462
    %v464 = vmul.f32 %v463, %v334
    %v465 = vsub.f32 1.0, %v463
    %v466 = vmul.f32 %v465, %v427
    %468 = vrot.lane.b32.xlu0 %v466, 96
    %v469 = vpop.permute.xlu0 %468
    %v471 = vadd.f32 %v464, %v469
    %v472 = vld [vmem:[#allocation12 + $0x4] sm:$0x1]
    %v473 = vld [vmem:[#allocation12 + $0x5] sm:$0x1]
    %v474 = vmax.f32 %v471, 0.0
    %476 = vrot.lane.b32.xlu0 %v474, 32
    %v477 = vpop.permute.xlu0 %476
    %v479 = vsel %vm338, %v477, 0.0
    %480 = vadd.xlane.f32.xlu0 %v479
    %v481 = vpop.xlane.xlu0 %480
    %v482 = vrcp.pop 32.0
    %v483 = vmul.f32 32.0, %v482
    %v484 = vsub.f32 1.0, %v483
    %v485 = vmul.f32 %v482, %v484
    %v486 = vadd.f32 %v482, %v485
    %vm487 = vweird.f32 %v482
    %v488 = vsel %vm487, %v482, %v486
    %v489 = vmul.f32 %v481, %v488
    %v490 = vsub.f32 %v474, %v489
    %v491 = vmul.f32 %v490, %v490
    %493 = vrot.lane.b32.xlu0 %v491, 32
    %v494 = vpop.permute.xlu0 %493
    %v496 = vsel %vm338, %v494, 0.0
    %497 = vadd.xlane.f32.xlu0 %v496
    %v498 = vpop.xlane.xlu0 %497
    %v499 = vmul.f32 %v498, %v488
    %v500 = vadd.f32 %v499, 1e-05
    %v501 = vrsqrt.pop %v500
    %v502 = vmul.f32 %v501, %v500
    %v503 = vmul.f32 %v502, %v501
    %v504 = vmul.f32 0.5, %v503
    %v505 = vsub.f32 1.5, %v504
    %v506 = vmul.f32 %v501, %v505
    %vm507 = vweird.f32 %v500
    %vm508 = vweird.f32 %v501
    %vm509 = vmor %vm507, %vm508
    %v510 = vsel %vm509, %v501, %v506
    %v511 = vmul.f32 %v490, %v510
    %v512 = vperm.slane %v472, 0
    %514 = vrot.lane.b32.xlu0 %v512, 96
    %v515 = vpop.permute.xlu0 %514
    %v517 = vmul.f32 %v511, %v515
    %v518 = vperm.slane %v473, 0
    %520 = vrot.lane.b32.xlu0 %v518, 96
    %v521 = vpop.permute.xlu0 %520
    %v523 = vadd.f32 %v517, %v521
    %v524 = vld [vmem:[#allocation9 + $0x8] sm:$0xff]
    %v525 = vld [vmem:[#allocation9 + $0x10] sm:$0xff]
    %v526 = vld [vmem:[#allocation9 + $0x18] sm:$0xff]
    %v527 = vld [vmem:[#allocation9 + $0x20] sm:$0xff]
    %v528 = vld [vmem:[#allocation12 + $0x6] sm:$0x1]
    %v529 = vld [vmem:[#allocation12 + $0x7] sm:$0x1]
    %v530 = vld [vmem:[#allocation12 + $0x8] sm:$0x1]
    %v531 = vld [vmem:[#allocation12 + $0x9] sm:$0x1]
    %v532 = vperm.slane %v528, 0
    %534 = vrot.lane.b32.xlu0 %v523, 32
    %v535 = vpop.permute.xlu0 %534
    %v536 = vsel %vm338, %v535, 0
    %538 = vmatpush.msra.mxu0 0.0
    %539 = vmatpush.msra.mxu0 0.0
    %540 = vmatpush.msra.mxu0 0.0
    %541 = vmatpush.msra.mxu0 0.0
    %542 = vmatpush.msra.mxu0 0.0
    %543 = vmatpush.msra.mxu0 0.0
    %544 = vmatpush.msra.mxu0 0.0
    %545 = vmatpush.msra.mxu0 0.0
    %546 = vmatpush.msra.mxu0 0.0
    %547 = vmatpush.msra.mxu0 0.0
    %548 = vmatpush.msra.mxu0 0.0
    %549 = vmatpush.msra.mxu0 0.0
    %550 = vmatpush.msra.mxu0 %v527
    %551 = vmatpush.msra.mxu0 %v526
    %552 = vmatpush.msra.mxu0 %v525
    %553 = vmatpush.msra.mxu0 %v524
    %554 = vmatmul.f32.gmra.mxu0 %v536
    %v555 = vpop.f32.mrf.mxu0
    %v556 = vadd.f32 %v532, %v555
    %557 = vdwg.mxu0
    %v558 = vperm.slane %v529, 0
    %v559 = vmul.f32 %v556, %v558
    %v560 = vsel %vm338, %v559, 0.0
    %561 = vadd.xlane.f32.xlu0 %v560
    %v562 = vpop.xlane.xlu0 %561
    %v563 = vmul.f32 %v302, %v562
    %565 = vrot.lane.b32.xlu0 %v556, 96
    %v566 = vpop.permute.xlu0 %565
    %v567 = vsel %vm338, %v556, 0
    %v569 = vsel %vm338, %v566, 0
    %571 = vmatpush.xpose.msra.mxu0 0.0
    %572 = vmatpush.xpose.msra.mxu0 0.0
    %573 = vmatpush.xpose.msra.mxu0 0.0
    %574 = vmatpush.xpose.msra.mxu0 0.0
    %575 = vmatpush.xpose.msra.mxu0 0.0
    %576 = vmatpush.xpose.msra.mxu0 0.0
    %577 = vmatpush.xpose.msra.mxu0 0.0
    %578 = vmatpush.xpose.msra.mxu0 0.0
    %579 = vmatpush.xpose.msra.mxu0 0.0
    %580 = vmatpush.xpose.msra.mxu0 0.0
    %581 = vmatpush.xpose.msra.mxu0 0.0
    %582 = vmatpush.xpose.msra.mxu0 0.0
    %583 = vmatpush.xpose.msra.mxu0 0.0
    %584 = vmatpush.xpose.msra.mxu0 0.0
    %585 = vmatpush.xpose.msra.mxu0 0.0
    %586 = vmatpush.xpose.msra.mxu0 %v569
    %587 = vmatmul.f32.gmra.mxu0 %v567
    %v588 = vpop.f32.mrf.mxu0
    %v589 = vadd.f32 %v563, %v588
    %590 = vdwg.mxu0
    %v591 = vadd.f32 %v589, %v304
    %v592 = vsel %vm312, %v591, -inf
    %593 = vmax.xlane.f32.xlu0 %v592
    %v594 = vpop.xlane.xlu0 %593
    %v595 = vsub.f32 %v591, %v594
    %v596 = vmul.f32 %v595, 1.442695
    %v597 = vpow.pop %v596
    %v598 = vmul.f32 %v597, %v299
    %v599 = vsel %vm312, %v598, 0.0
    %600 = vadd.xlane.f32.xlu0 %v599
    %v601 = vpop.xlane.xlu0 %600
    %vm602 = vcmp.gt.f32.partialorder %v601, 0.0
    %v603 = vsel %vm602, %v601, 1.0
    %v604 = vrcp.pop %v603
    %v605 = vmul.f32 %v603, %v604
    %v606 = vsub.f32 1.0, %v605
    %v607 = vmul.f32 %v604, %v606
    %v608 = vadd.f32 %v604, %v607
    %vm609 = vweird.f32 %v603
    %vm610 = vweird.f32 %v604
    %vm611 = vmor %vm609, %vm610
    %v612 = vsel %vm611, %v604, %v608
    %v613 = vand.u32 2147483647, %v603
    %vm614 = vcmp.eq.f32.partialorder %v613, 8.507059e+37
    %v615 = vand.u32 %v603, 2147483648
    %v616 = vor.u32 1.1754944e-38, %v615
    %v617 = vsel %vm614, %v616, %v612
    %v618 = vmul.f32 %v598, %v617
    %v619 = vmul.f32 %v618, %v302
    %v620 = vsel %vm312, %v619, 0.0
    %621 = vadd.xlane.f32.xlu0 %v620
    %v622 = vpop.xlane.xlu0 %621
    %v623 = vmul.f32 %v622, %v558
    %624 = vrot.lane.b32.xlu0 %v556, 64
    %v625 = vpop.permute.xlu0 %624
    %v628 = vsel %vm312, %v618, 0
    %630 = vmatpush.msra.mxu0 0.0
    %631 = vmatpush.msra.mxu0 0.0
    %632 = vmatpush.msra.mxu0 0.0
    %633 = vmatpush.msra.mxu0 0.0
    %634 = vmatpush.msra.mxu0 0.0
    %635 = vmatpush.msra.mxu0 0.0
    %636 = vmatpush.msra.mxu0 0.0
    %637 = vmatpush.msra.mxu0 0.0
    %638 = vmatpush.msra.mxu0 0.0
    %639 = vmatpush.msra.mxu0 0.0
    %640 = vmatpush.msra.mxu0 0.0
    %641 = vmatpush.msra.mxu0 0.0
    %642 = vmatpush.msra.mxu0 0.0
    %643 = vmatpush.msra.mxu0 0.0
    %644 = vmatpush.msra.mxu0 0.0
    %645 = vmatpush.msra.mxu0 %v625
    %646 = vmatmul.f32.gmra.mxu0 %v628
    %v647 = vpop.f32.mrf.mxu0
    %v648 = vadd.f32 %v623, %v647
    %649 = vdwg.mxu0
    %v650 = vperm.slane %v530, 0
    %v651 = vmul.f32 %v648, %v650
    %v652 = vperm.slane %v531, 0
    %654 = vrot.lane.b32.xlu0 %v652, 96
    %v655 = vpop.permute.xlu0 %654
    %v657 = vmul.f32 %v556, %v655
    %659 = vrot.lane.b32.xlu0 %v657, 32
    %v660 = vpop.permute.xlu0 %659
    %v662 = vadd.f32 %v651, %v660
    %v663 = vsel %vm338, %v662, 0.0
    %664 = vadd.xlane.f32.xlu0 %v663
    %v665 = vpop.xlane.xlu0 %664
    %v666 = vxor.u32 %v665, 2147483648
    %v667 = vmul.f32 %v666, 1.442695
    %v668 = vpow.pop %v667
    %v669 = vadd.f32 %v668, 1.0
    %v670 = vrcp.pop %v669
    %v671 = vmul.f32 %v669, %v670
    %v672 = vsub.f32 1.0, %v671
    %v673 = vmul.f32 %v670, %v672
    %v674 = vadd.f32 %v670, %v673
    %vm675 = vweird.f32 %v669
    %vm676 = vweird.f32 %v670
    %vm677 = vmor %vm675, %vm676
    %v678 = vsel %vm677, %v670, %v674
    %v679 = vand.u32 2147483647, %v669
    %vm680 = vcmp.eq.f32.partialorder %v679, 8.507059e+37
    %v681 = vand.u32 %v669, 2147483648
    %v682 = vor.u32 1.1754944e-38, %v681
    %v683 = vsel %vm680, %v682, %v678
    %v684 = vmul.f32 1.0, %v683
    %v685 = vmul.f32 %v684, %v556
    %v686 = vsub.f32 1.0, %v684
    %v687 = vmul.f32 %v686, %v648
    %689 = vrot.lane.b32.xlu0 %v687, 96
    %v690 = vpop.permute.xlu0 %689
    %v692 = vadd.f32 %v685, %v690
    %v693 = vld [vmem:[#allocation12 + $0xa] sm:$0x1]
    %v694 = vld [vmem:[#allocation12 + $0xb] sm:$0x1]
    %v695 = vmax.f32 %v692, 0.0
    %697 = vrot.lane.b32.xlu0 %v695, 32
    %v698 = vpop.permute.xlu0 %697
    %v700 = vsel %vm338, %v698, 0.0
    %701 = vadd.xlane.f32.xlu0 %v700
    %v702 = vpop.xlane.xlu0 %701
    %v703 = vmul.f32 %v702, %v488
    %v704 = vsub.f32 %v695, %v703
    %v705 = vmul.f32 %v704, %v704
    %707 = vrot.lane.b32.xlu0 %v705, 32
    %v708 = vpop.permute.xlu0 %707
    %v710 = vsel %vm338, %v708, 0.0
    %711 = vadd.xlane.f32.xlu0 %v710
    %v712 = vpop.xlane.xlu0 %711
    %v713 = vmul.f32 %v712, %v488
    %v714 = vadd.f32 %v713, 1e-05
    %v715 = vrsqrt.pop %v714
    %v716 = vmul.f32 %v715, %v714
    %v717 = vmul.f32 %v716, %v715
    %v718 = vmul.f32 0.5, %v717
    %v719 = vsub.f32 1.5, %v718
    %v720 = vmul.f32 %v715, %v719
    %vm721 = vweird.f32 %v714
    %vm722 = vweird.f32 %v715
    %vm723 = vmor %vm721, %vm722
    %v724 = vsel %vm723, %v715, %v720
    %v725 = vmul.f32 %v704, %v724
    %v726 = vperm.slane %v693, 0
    %728 = vrot.lane.b32.xlu0 %v726, 96
    %v729 = vpop.permute.xlu0 %728
    %v731 = vmul.f32 %v725, %v729
    %v732 = vperm.slane %v694, 0
    %734 = vrot.lane.b32.xlu0 %v732, 96
    %v735 = vpop.permute.xlu0 %734
    %v737 = vadd.f32 %v731, %v735
    %v738 = vld [vmem:[#allocation9 + $0x28] sm:$0xff]
    %v739 = vld [vmem:[#allocation9 + $0x30] sm:$0xff]
    %v740 = vld [vmem:[#allocation9 + $0x38] sm:$0xff]
    %v741 = vld [vmem:[#allocation9 + $0x40] sm:$0xff]
    %v742 = vld [vmem:[#allocation12 + $0xc] sm:$0x1]
    %v743 = vld [vmem:[#allocation12 + $0xd] sm:$0x1]
    %v744 = vld [vmem:[#allocation12 + $0xe] sm:$0x1]
    %v745 = vld [vmem:[#allocation12 + $0xf] sm:$0x1]
    %v746 = vperm.slane %v742, 0
    %748 = vrot.lane.b32.xlu0 %v737, 32
    %v749 = vpop.permute.xlu0 %748
    %v750 = vsel %vm338, %v749, 0
    %752 = vmatpush.msra.mxu0 0.0
    %753 = vmatpush.msra.mxu0 0.0
    %754 = vmatpush.msra.mxu0 0.0
    %755 = vmatpush.msra.mxu0 0.0
    %756 = vmatpush.msra.mxu0 0.0
    %757 = vmatpush.msra.mxu0 0.0
    %758 = vmatpush.msra.mxu0 0.0
    %759 = vmatpush.msra.mxu0 0.0
    %760 = vmatpush.msra.mxu0 0.0
    %761 = vmatpush.msra.mxu0 0.0
    %762 = vmatpush.msra.mxu0 0.0
    %763 = vmatpush.msra.mxu0 0.0
    %764 = vmatpush.msra.mxu0 %v741
    %765 = vmatpush.msra.mxu0 %v740
    %766 = vmatpush.msra.mxu0 %v739
    %767 = vmatpush.msra.mxu0 %v738
    %768 = vmatmul.f32.gmra.mxu0 %v750
    %v769 = vpop.f32.mrf.mxu0
    %v770 = vadd.f32 %v746, %v769
    %771 = vdwg.mxu0
    %v772 = vperm.slane %v743, 0
    %v773 = vmul.f32 %v770, %v772
    %v774 = vsel %vm338, %v773, 0.0
    %775 = vadd.xlane.f32.xlu0 %v774
    %v776 = vpop.xlane.xlu0 %775
    %v777 = vmul.f32 %v302, %v776
    %779 = vrot.lane.b32.xlu0 %v770, 96
    %v780 = vpop.permute.xlu0 %779
    %v781 = vsel %vm338, %v770, 0
    %v783 = vsel %vm338, %v780, 0
    %785 = vmatpush.xpose.msra.mxu0 0.0
    %786 = vmatpush.xpose.msra.mxu0 0.0
    %787 = vmatpush.xpose.msra.mxu0 0.0
    %788 = vmatpush.xpose.msra.mxu0 0.0
    %789 = vmatpush.xpose.msra.mxu0 0.0
    %790 = vmatpush.xpose.msra.mxu0 0.0
    %791 = vmatpush.xpose.msra.mxu0 0.0
    %792 = vmatpush.xpose.msra.mxu0 0.0
    %793 = vmatpush.xpose.msra.mxu0 0.0
    %794 = vmatpush.xpose.msra.mxu0 0.0
    %795 = vmatpush.xpose.msra.mxu0 0.0
    %796 = vmatpush.xpose.msra.mxu0 0.0
    %797 = vmatpush.xpose.msra.mxu0 0.0
    %798 = vmatpush.xpose.msra.mxu0 0.0
    %799 = vmatpush.xpose.msra.mxu0 0.0
    %800 = vmatpush.xpose.msra.mxu0 %v783
    %801 = vmatmul.f32.gmra.mxu0 %v781
    %v802 = vpop.f32.mrf.mxu0
    %v803 = vadd.f32 %v777, %v802
    %804 = vdwg.mxu0
    %v805 = vadd.f32 %v803, %v304
    %v806 = vsel %vm312, %v805, -inf
    %807 = vmax.xlane.f32.xlu0 %v806
    %v808 = vpop.xlane.xlu0 %807
    %v809 = vsub.f32 %v805, %v808
    %v810 = vmul.f32 %v809, 1.442695
    %v811 = vpow.pop %v810
    %v812 = vmul.f32 %v811, %v299
    %v813 = vsel %vm312, %v812, 0.0
    %814 = vadd.xlane.f32.xlu0 %v813
    %v815 = vpop.xlane.xlu0 %814
    %vm816 = vcmp.gt.f32.partialorder %v815, 0.0
    %v817 = vsel %vm816, %v815, 1.0
    %v818 = vrcp.pop %v817
    %v819 = vmul.f32 %v817, %v818
    %v820 = vsub.f32 1.0, %v819
    %v821 = vmul.f32 %v818, %v820
    %v822 = vadd.f32 %v818, %v821
    %vm823 = vweird.f32 %v817
    %vm824 = vweird.f32 %v818
    %vm825 = vmor %vm823, %vm824
    %v826 = vsel %vm825, %v818, %v822
    %v827 = vand.u32 2147483647, %v817
    %vm828 = vcmp.eq.f32.partialorder %v827, 8.507059e+37
    %v829 = vand.u32 %v817, 2147483648
    %v830 = vor.u32 1.1754944e-38, %v829
    %v831 = vsel %vm828, %v830, %v826
    %v832 = vmul.f32 %v812, %v831
    %v833 = vmul.f32 %v832, %v302
    %v834 = vsel %vm312, %v833, 0.0
    %835 = vadd.xlane.f32.xlu0 %v834
    %v836 = vpop.xlane.xlu0 %835
    %v837 = vmul.f32 %v836, %v772
    %838 = vrot.lane.b32.xlu0 %v770, 64
    %v839 = vpop.permute.xlu0 %838
    %v842 = vsel %vm312, %v832, 0
    %844 = vmatpush.msra.mxu0 0.0
    %845 = vmatpush.msra.mxu0 0.0
    %846 = vmatpush.msra.mxu0 0.0
    %847 = vmatpush.msra.mxu0 0.0
    %848 = vmatpush.msra.mxu0 0.0
    %849 = vmatpush.msra.mxu0 0.0
    %850 = vmatpush.msra.mxu0 0.0
    %851 = vmatpush.msra.mxu0 0.0
    %852 = vmatpush.msra.mxu0 0.0
    %853 = vmatpush.msra.mxu0 0.0
    %854 = vmatpush.msra.mxu0 0.0
    %855 = vmatpush.msra.mxu0 0.0
    %856 = vmatpush.msra.mxu0 0.0
    %857 = vmatpush.msra.mxu0 0.0
    %858 = vmatpush.msra.mxu0 0.0
    %859 = vmatpush.msra.mxu0 %v839
    %860 = vmatmul.f32.gmra.mxu0 %v842
    %v861 = vpop.f32.mrf.mxu0
    %v862 = vadd.f32 %v837, %v861
    %863 = vdwg.mxu0
    %v864 = vperm.slane %v744, 0
    %v865 = vmul.f32 %v862, %v864
    %v866 = vperm.slane %v745, 0
    %868 = vrot.lane.b32.xlu0 %v866, 96
    %v869 = vpop.permute.xlu0 %868
    %v871 = vmul.f32 %v770, %v869
    %873 = vrot.lane.b32.xlu0 %v871, 32
    %v874 = vpop.permute.xlu0 %873
    %v876 = vadd.f32 %v865, %v874
    %v877 = vsel %vm338, %v876, 0.0
    %878 = vadd.xlane.f32.xlu0 %v877
    %v879 = vpop.xlane.xlu0 %878
    %v880 = vxor.u32 %v879, 2147483648
    %v881 = vmul.f32 %v880, 1.442695
    %v882 = vpow.pop %v881
    %v883 = vadd.f32 %v882, 1.0
    %v884 = vrcp.pop %v883
    %v885 = vmul.f32 %v883, %v884
    %v886 = vsub.f32 1.0, %v885
    %v887 = vmul.f32 %v884, %v886
    %v888 = vadd.f32 %v884, %v887
    %vm889 = vweird.f32 %v883
    %vm890 = vweird.f32 %v884
    %vm891 = vmor %vm889, %vm890
    %v892 = vsel %vm891, %v884, %v888
    %v893 = vand.u32 2147483647, %v883
    %vm894 = vcmp.eq.f32.partialorder %v893, 8.507059e+37
    %v895 = vand.u32 %v883, 2147483648
    %v896 = vor.u32 1.1754944e-38, %v895
    %v897 = vsel %vm894, %v896, %v892
    %v898 = vmul.f32 1.0, %v897
    %v899 = vmul.f32 %v898, %v770
    %v900 = vsub.f32 1.0, %v898
    %v901 = vmul.f32 %v900, %v862
    %903 = vrot.lane.b32.xlu0 %v901, 96
    %v904 = vpop.permute.xlu0 %903
    %v906 = vadd.f32 %v899, %v904
    %v907 = vld [vmem:[#allocation9 + $0x48] sm:$0xff]
    %v908 = vld [vmem:[#allocation9 + $0x50] sm:$0xff]
    %v909 = vld [vmem:[#allocation9 + $0x58] sm:$0xff]
    %v910 = vld [vmem:[#allocation9 + $0x60] sm:$0xff]
    %v911 = vld [vmem:[#allocation12 + $0x12] sm:$0x1]
    %v912 = vperm.slane %v911, 0
    %914 = vrot.lane.b32.xlu0 %v906, 32
    %v915 = vpop.permute.xlu0 %914
    %v916 = vsel %vm338, %v915, 0
    %918 = vmatpush.msra.mxu0 0.0
    %919 = vmatpush.msra.mxu0 0.0
    %920 = vmatpush.msra.mxu0 0.0
    %921 = vmatpush.msra.mxu0 0.0
    %922 = vmatpush.msra.mxu0 0.0
    %923 = vmatpush.msra.mxu0 0.0
    %924 = vmatpush.msra.mxu0 0.0
    %925 = vmatpush.msra.mxu0 0.0
    %926 = vmatpush.msra.mxu0 0.0
    %927 = vmatpush.msra.mxu0 0.0
    %928 = vmatpush.msra.mxu0 0.0
    %929 = vmatpush.msra.mxu0 0.0
    %930 = vmatpush.msra.mxu0 %v910
    %931 = vmatpush.msra.mxu0 %v909
    %932 = vmatpush.msra.mxu0 %v908
    %933 = vmatpush.msra.mxu0 %v907
    %934 = vmatmul.f32.gmra.mxu0 %v916
    %v935 = vpop.f32.mrf.mxu0
    %v936 = vadd.f32 %v912, %v935
    %937 = vdwg.mxu0
    %v938 = vld [vmem:[#allocation11] sm:$0xff]
    %v939 = vld [vmem:[#allocation11 + $0x8] sm:$0xff]
    %v940 = vld [vmem:[#allocation11 + $0x10] sm:$0xff]
    %v941 = vld [vmem:[#allocation11 + $0x18] sm:$0xff]
    %v942 = vld [vmem:[#allocation11 + $0x20] sm:$0xff]
    %v943 = vld [vmem:[#allocation11 + $0x28] sm:$0xff]
    %v944 = vld [vmem:[#allocation11 + $0x30] sm:$0xff]
    %v945 = vld [vmem:[#allocation11 + $0x38] sm:$0xff]
    %v947 = vsel %vm312, %v936, 0
    %949 = vmatpush.msra.mxu0 0.0
    %950 = vmatpush.msra.mxu0 0.0
    %951 = vmatpush.msra.mxu0 0.0
    %952 = vmatpush.msra.mxu0 0.0
    %953 = vmatpush.msra.mxu0 0.0
    %954 = vmatpush.msra.mxu0 0.0
    %955 = vmatpush.msra.mxu0 0.0
    %956 = vmatpush.msra.mxu0 0.0
    %957 = vmatpush.msra.mxu0 0.0
    %958 = vmatpush.msra.mxu0 0.0
    %959 = vmatpush.msra.mxu0 0.0
    %960 = vmatpush.msra.mxu0 0.0
    %961 = vmatpush.msra.mxu0 0.0
    %962 = vmatpush.msra.mxu0 0.0
    %963 = vmatpush.msra.mxu0 0.0
    %964 = vmatpush.msra.mxu0 %v942
    %965 = vmatmul.f32.gmra.mxu0 %v947
    %v966 = vpop.f32.mrf.mxu0
    %v967 = vadd.f32 0.0, %v966
    %968 = vdwg.mxu0
    %969 = vmatpush.msra.mxu0 0.0
    %970 = vmatpush.msra.mxu0 0.0
    %971 = vmatpush.msra.mxu0 0.0
    %972 = vmatpush.msra.mxu0 0.0
    %973 = vmatpush.msra.mxu0 0.0
    %974 = vmatpush.msra.mxu0 0.0
    %975 = vmatpush.msra.mxu0 0.0
    %976 = vmatpush.msra.mxu0 0.0
    %977 = vmatpush.msra.mxu0 0.0
    %978 = vmatpush.msra.mxu0 0.0
    %979 = vmatpush.msra.mxu0 0.0
    %980 = vmatpush.msra.mxu0 0.0
    %981 = vmatpush.msra.mxu0 0.0
    %982 = vmatpush.msra.mxu0 0.0
    %983 = vmatpush.msra.mxu0 0.0
    %984 = vmatpush.msra.mxu0 %v943
    %985 = vmatmul.f32.gmra.mxu0 %v947
    %v986 = vpop.f32.mrf.mxu0
    %v987 = vadd.f32 0.0, %v986
    %988 = vdwg.mxu0
    %989 = vmatpush.msra.mxu0 0.0
    %990 = vmatpush.msra.mxu0 0.0
    %991 = vmatpush.msra.mxu0 0.0
    %992 = vmatpush.msra.mxu0 0.0
    %993 = vmatpush.msra.mxu0 0.0
    %994 = vmatpush.msra.mxu0 0.0
    %995 = vmatpush.msra.mxu0 0.0
    %996 = vmatpush.msra.mxu0 0.0
    %997 = vmatpush.msra.mxu0 0.0
    %998 = vmatpush.msra.mxu0 0.0
    %999 = vmatpush.msra.mxu0 0.0
    %1000 = vmatpush.msra.mxu0 0.0
    %1001 = vmatpush.msra.mxu0 0.0
    %1002 = vmatpush.msra.mxu0 0.0
    %1003 = vmatpush.msra.mxu0 0.0
    %1004 = vmatpush.msra.mxu0 %v944
    %1005 = vmatmul.f32.gmra.mxu0 %v947
    %v1006 = vpop.f32.mrf.mxu0
    %v1007 = vadd.f32 0.0, %v1006
    %1008 = vdwg.mxu0
    %1009 = vmatpush.msra.mxu0 0.0
    %1010 = vmatpush.msra.mxu0 0.0
    %1011 = vmatpush.msra.mxu0 0.0
    %1012 = vmatpush.msra.mxu0 0.0
    %1013 = vmatpush.msra.mxu0 0.0
    %1014 = vmatpush.msra.mxu0 0.0
    %1015 = vmatpush.msra.mxu0 0.0
    %1016 = vmatpush.msra.mxu0 0.0
    %1017 = vmatpush.msra.mxu0 0.0
    %1018 = vmatpush.msra.mxu0 0.0
    %1019 = vmatpush.msra.mxu0 0.0
    %1020 = vmatpush.msra.mxu0 0.0
    %1021 = vmatpush.msra.mxu0 0.0
    %1022 = vmatpush.msra.mxu0 0.0
    %1023 = vmatpush.msra.mxu0 0.0
    %1024 = vmatpush.msra.mxu0 %v945
    %1025 = vmatmul.f32.gmra.mxu0 %v947
    %v1026 = vpop.f32.mrf.mxu0
    %v1027 = vadd.f32 0.0, %v1026
    %1028 = vdwg.mxu0
    %1029 = vmatpush.msra.mxu0 0.0
    %1030 = vmatpush.msra.mxu0 0.0
    %1031 = vmatpush.msra.mxu0 0.0
    %1032 = vmatpush.msra.mxu0 0.0
    %1033 = vmatpush.msra.mxu0 0.0
    %1034 = vmatpush.msra.mxu0 0.0
    %1035 = vmatpush.msra.mxu0 0.0
    %1036 = vmatpush.msra.mxu0 0.0
    %1037 = vmatpush.msra.mxu0 0.0
    %1038 = vmatpush.msra.mxu0 0.0
    %1039 = vmatpush.msra.mxu0 0.0
    %1040 = vmatpush.msra.mxu0 0.0
    %1041 = vmatpush.msra.mxu0 0.0
    %1042 = vmatpush.msra.mxu0 0.0
    %1043 = vmatpush.msra.mxu0 0.0
    %1044 = vmatpush.msra.mxu0 %v938
    %1045 = vmatmul.f32.gmra.mxu0 %v314
    %v1046 = vpop.f32.mrf.mxu0
    %v1047 = vadd.f32 %v967, %v1046
    %1048 = vdwg.mxu0
    %1049 = vmatpush.msra.mxu0 0.0
    %1050 = vmatpush.msra.mxu0 0.0
    %1051 = vmatpush.msra.mxu0 0.0
    %1052 = vmatpush.msra.mxu0 0.0
    %1053 = vmatpush.msra.mxu0 0.0
    %1054 = vmatpush.msra.mxu0 0.0
    %1055 = vmatpush.msra.mxu0 0.0
    %1056 = vmatpush.msra.mxu0 0.0
    %1057 = vmatpush.msra.mxu0 0.0
    %1058 = vmatpush.msra.mxu0 0.0
    %1059 = vmatpush.msra.mxu0 0.0
    %1060 = vmatpush.msra.mxu0 0.0
    %1061 = vmatpush.msra.mxu0 0.0
    %1062 = vmatpush.msra.mxu0 0.0
    %1063 = vmatpush.msra.mxu0 0.0
    %1064 = vmatpush.msra.mxu0 %v939
    %1065 = vmatmul.f32.gmra.mxu0 %v314
    %v1066 = vpop.f32.mrf.mxu0
    %v1067 = vadd.f32 %v987, %v1066
    %1068 = vdwg.mxu0
    %1069 = vmatpush.msra.mxu0 0.0
    %1070 = vmatpush.msra.mxu0 0.0
    %1071 = vmatpush.msra.mxu0 0.0
    %1072 = vmatpush.msra.mxu0 0.0
    %1073 = vmatpush.msra.mxu0 0.0
    %1074 = vmatpush.msra.mxu0 0.0
    %1075 = vmatpush.msra.mxu0 0.0
    %1076 = vmatpush.msra.mxu0 0.0
    %1077 = vmatpush.msra.mxu0 0.0
    %1078 = vmatpush.msra.mxu0 0.0
    %1079 = vmatpush.msra.mxu0 0.0
    %1080 = vmatpush.msra.mxu0 0.0
    %1081 = vmatpush.msra.mxu0 0.0
    %1082 = vmatpush.msra.mxu0 0.0
    %1083 = vmatpush.msra.mxu0 0.0
    %1084 = vmatpush.msra.mxu0 %v940
    %1085 = vmatmul.f32.gmra.mxu0 %v314
    %v1086 = vpop.f32.mrf.mxu0
    %v1087 = vadd.f32 %v1007, %v1086
    %1088 = vdwg.mxu0
    %1089 = vmatpush.msra.mxu0 0.0
    %1090 = vmatpush.msra.mxu0 0.0
    %1091 = vmatpush.msra.mxu0 0.0
    %1092 = vmatpush.msra.mxu0 0.0
    %1093 = vmatpush.msra.mxu0 0.0
    %1094 = vmatpush.msra.mxu0 0.0
    %1095 = vmatpush.msra.mxu0 0.0
    %1096 = vmatpush.msra.mxu0 0.0
    %1097 = vmatpush.msra.mxu0 0.0
    %1098 = vmatpush.msra.mxu0 0.0
    %1099 = vmatpush.msra.mxu0 0.0
    %1100 = vmatpush.msra.mxu0 0.0
    %1101 = vmatpush.msra.mxu0 0.0
    %1102 = vmatpush.msra.mxu0 0.0
    %1103 = vmatpush.msra.mxu0 0.0
    %1104 = vmatpush.msra.mxu0 %v941
    %1105 = vmatmul.f32.gmra.mxu0 %v314
    %v1106 = vpop.f32.mrf.mxu0
    %v1107 = vadd.f32 %v1027, %v1106
    %1108 = vdwg.mxu0
    %v1109 = vld [vmem:[#allocation12 + $0x13] sm:$0x1]
    %vm1110 = vcmp.eq.s32.totalorder %v124, 0
    %s1111 = sld [smem:[#allocation8]]
    %v1112 = vstv %s1111
    %vm1113 = vcmp.eq.s32.totalorder %v126, %v1112
    %vm1114 = vmand %vm1110, %vm1113
    %v1115 = vsel %vm1114, 1.0, 0.0
    %vm1116 = vcmp.eq.s32.totalorder %v124, 1
    %s1117 = sld [smem:[#allocation8 + $0x1]]
    %v1118 = vstv %s1117
    %vm1119 = vcmp.eq.s32.totalorder %v126, %v1118
    %vm1120 = vmand %vm1116, %vm1119
    %v1121 = vsel %vm1120, 1.0, %v1115
    %vm1122 = vcmp.eq.s32.totalorder %v124, 2
    %s1123 = sld [smem:[#allocation8 + $0x2]]
    %v1124 = vstv %s1123
    %vm1125 = vcmp.eq.s32.totalorder %v126, %v1124
    %vm1126 = vmand %vm1122, %vm1125
    %v1127 = vsel %vm1126, 1.0, %v1121
    %vm1128 = vcmp.eq.s32.totalorder %v124, 3
    %s1129 = sld [smem:[#allocation8 + $0x3]]
    %v1130 = vstv %s1129
    %vm1131 = vcmp.eq.s32.totalorder %v126, %v1130
    %vm1132 = vmand %vm1128, %vm1131
    %v1133 = vsel %vm1132, 1.0, %v1127
    %v1135 = vsel %vm312, %v1133, 0
    %1137 = vmatpush.msra.mxu0 0.0
    %1138 = vmatpush.msra.mxu0 0.0
    %1139 = vmatpush.msra.mxu0 0.0
    %1140 = vmatpush.msra.mxu0 0.0
    %1141 = vmatpush.msra.mxu0 0.0
    %1142 = vmatpush.msra.mxu0 0.0
    %1143 = vmatpush.msra.mxu0 0.0
    %1144 = vmatpush.msra.mxu0 0.0
    %1145 = vmatpush.msra.mxu0 0.0
    %1146 = vmatpush.msra.mxu0 0.0
    %1147 = vmatpush.msra.mxu0 0.0
    %1148 = vmatpush.msra.mxu0 0.0
    %1149 = vmatpush.msra.mxu0 0.0
    %1150 = vmatpush.msra.mxu0 0.0
    %1151 = vmatpush.msra.mxu0 0.0
    %1152 = vmatpush.msra.mxu0 %v1047
    %1153 = vmatmul.f32.gmra.mxu0 %v1135
    %v1154 = vpop.f32.mrf.mxu0
    %v1155 = vadd.f32 0.0, %v1154
    %1156 = vdwg.mxu0
    %v1157 = vperm.slane %v1109, 0
    %v1158 = vadd.f32 %v1157, %v1155
    %s1159 = sld [smem:[#allocation8 + $0x4]]
    %v1160 = vstv %s1159
    %vm1161 = vcmp.eq.s32.totalorder %v126, %v1160
    %vm1162 = vmand %vm1110, %vm1161
    %v1163 = vsel %vm1162, 1.0, 0.0
    %s1164 = sld [smem:[#allocation8 + $0x5]]
    %v1165 = vstv %s1164
    %vm1166 = vcmp.eq.s32.totalorder %v126, %v1165
    %vm1167 = vmand %vm1116, %vm1166
    %v1168 = vsel %vm1167, 1.0, %v1163
    %s1169 = sld [smem:[#allocation8 + $0x6]]
    %v1170 = vstv %s1169
    %vm1171 = vcmp.eq.s32.totalorder %v126, %v1170
    %vm1172 = vmand %vm1122, %vm1171
    %v1173 = vsel %vm1172, 1.0, %v1168
    %s1174 = sld [smem:[#allocation8 + $0x7]]
    %v1175 = vstv %s1174
    %vm1176 = vcmp.eq.s32.totalorder %v126, %v1175
    %vm1177 = vmand %vm1128, %vm1176
    %v1178 = vsel %vm1177, 1.0, %v1173
    %v1180 = vsel %vm312, %v1178, 0
    %1182 = vmatpush.msra.mxu0 0.0
    %1183 = vmatpush.msra.mxu0 0.0
    %1184 = vmatpush.msra.mxu0 0.0
    %1185 = vmatpush.msra.mxu0 0.0
    %1186 = vmatpush.msra.mxu0 0.0
    %1187 = vmatpush.msra.mxu0 0.0
    %1188 = vmatpush.msra.mxu0 0.0
    %1189 = vmatpush.msra.mxu0 0.0
    %1190 = vmatpush.msra.mxu0 0.0
    %1191 = vmatpush.msra.mxu0 0.0
    %1192 = vmatpush.msra.mxu0 0.0
    %1193 = vmatpush.msra.mxu0 0.0
    %1194 = vmatpush.msra.mxu0 0.0
    %1195 = vmatpush.msra.mxu0 0.0
    %1196 = vmatpush.msra.mxu0 0.0
    %1197 = vmatpush.msra.mxu0 %v1067
    %1198 = vmatmul.f32.gmra.mxu0 %v1180
    %v1199 = vpop.f32.mrf.mxu0
    %v1200 = vadd.f32 0.0, %v1199
    %1201 = vdwg.mxu0
    %v1202 = vadd.f32 %v1158, %v1200
    %s1203 = sld [smem:[#allocation8 + $0x8]]
    %v1204 = vstv %s1203
    %vm1205 = vcmp.eq.s32.totalorder %v126, %v1204
    %vm1206 = vmand %vm1110, %vm1205
    %v1207 = vsel %vm1206, 1.0, 0.0
    %s1208 = sld [smem:[#allocation8 + $0x9]]
    %v1209 = vstv %s1208
    %vm1210 = vcmp.eq.s32.totalorder %v126, %v1209
    %vm1211 = vmand %vm1116, %vm1210
    %v1212 = vsel %vm1211, 1.0, %v1207
    %s1213 = sld [smem:[#allocation8 + $0xa]]
    %v1214 = vstv %s1213
    %vm1215 = vcmp.eq.s32.totalorder %v126, %v1214
    %vm1216 = vmand %vm1122, %vm1215
    %v1217 = vsel %vm1216, 1.0, %v1212
    %s1218 = sld [smem:[#allocation8 + $0xb]]
    %v1219 = vstv %s1218
    %vm1220 = vcmp.eq.s32.totalorder %v126, %v1219
    %vm1221 = vmand %vm1128, %vm1220
    %v1222 = vsel %vm1221, 1.0, %v1217
    %v1224 = vsel %vm312, %v1222, 0
    %1226 = vmatpush.msra.mxu0 0.0
    %1227 = vmatpush.msra.mxu0 0.0
    %1228 = vmatpush.msra.mxu0 0.0
    %1229 = vmatpush.msra.mxu0 0.0
    %1230 = vmatpush.msra.mxu0 0.0
    %1231 = vmatpush.msra.mxu0 0.0
    %1232 = vmatpush.msra.mxu0 0.0
    %1233 = vmatpush.msra.mxu0 0.0
    %1234 = vmatpush.msra.mxu0 0.0
    %1235 = vmatpush.msra.mxu0 0.0
    %1236 = vmatpush.msra.mxu0 0.0
    %1237 = vmatpush.msra.mxu0 0.0
    %1238 = vmatpush.msra.mxu0 0.0
    %1239 = vmatpush.msra.mxu0 0.0
    %1240 = vmatpush.msra.mxu0 0.0
    %1241 = vmatpush.msra.mxu0 %v1087
    %1242 = vmatmul.f32.gmra.mxu0 %v1224
    %v1243 = vpop.f32.mrf.mxu0
    %v1244 = vadd.f32 0.0, %v1243
    %1245 = vdwg.mxu0
    %v1246 = vadd.f32 %v1202, %v1244
    %s1247 = sld [smem:[#allocation8 + $0xc]]
    %v1248 = vstv %s1247
    %vm1249 = vcmp.eq.s32.totalorder %v126, %v1248
    %vm1250 = vmand %vm1110, %vm1249
    %v1251 = vsel %vm1250, 1.0, 0.0
    %s1252 = sld [smem:[#allocation8 + $0xd]]
    %v1253 = vstv %s1252
    %vm1254 = vcmp.eq.s32.totalorder %v126, %v1253
    %vm1255 = vmand %vm1116, %vm1254
    %v1256 = vsel %vm1255, 1.0, %v1251
    %s1257 = sld [smem:[#allocation8 + $0xe]]
    %v1258 = vstv %s1257
    %vm1259 = vcmp.eq.s32.totalorder %v126, %v1258
    %vm1260 = vmand %vm1122, %vm1259
    %v1261 = vsel %vm1260, 1.0, %v1256
    %s1262 = sld [smem:[#allocation8 + $0xf]]
    %v1263 = vstv %s1262
    %vm1264 = vcmp.eq.s32.totalorder %v126, %v1263
    %vm1265 = vmand %vm1128, %vm1264
    %v1266 = vsel %vm1265, 1.0, %v1261
    %v1268 = vsel %vm312, %v1266, 0
    %1270 = vmatpush.msra.mxu0 0.0
    %1271 = vmatpush.msra.mxu0 0.0
    %1272 = vmatpush.msra.mxu0 0.0
    %1273 = vmatpush.msra.mxu0 0.0
    %1274 = vmatpush.msra.mxu0 0.0
    %1275 = vmatpush.msra.mxu0 0.0
    %1276 = vmatpush.msra.mxu0 0.0
    %1277 = vmatpush.msra.mxu0 0.0
    %1278 = vmatpush.msra.mxu0 0.0
    %1279 = vmatpush.msra.mxu0 0.0
    %1280 = vmatpush.msra.mxu0 0.0
    %1281 = vmatpush.msra.mxu0 0.0
    %1282 = vmatpush.msra.mxu0 0.0
    %1283 = vmatpush.msra.mxu0 0.0
    %1284 = vmatpush.msra.mxu0 0.0
    %1285 = vmatpush.msra.mxu0 %v1107
    %1286 = vmatmul.f32.gmra.mxu0 %v1268
    %v1287 = vpop.f32.mrf.mxu0
    %v1288 = vadd.f32 0.0, %v1287
    %1289 = vdwg.mxu0
    %v1290 = vadd.f32 %v1246, %v1288
    %v1291 = vmax.f32 %v1290, 0.0
    %1292 = vadd.xlane.f32.xlu0 %v1291
    %v1293 = vpop.xlane.xlu0 %1292
    %v1294 = vrcp.pop 128.0
    %v1295 = vmul.f32 128.0, %v1294
    %v1296 = vsub.f32 1.0, %v1295
    %v1297 = vmul.f32 %v1294, %v1296
    %v1298 = vadd.f32 %v1294, %v1297
    %vm1299 = vweird.f32 %v1294
    %v1300 = vsel %vm1299, %v1294, %v1298
    %v1301 = vmul.f32 %v1293, %v1300
    %v1302 = vsub.f32 %v1291, %v1301
    %v1303 = vmul.f32 %v1302, %v1302
    %1304 = vadd.xlane.f32.xlu0 %v1303
    %v1305 = vpop.xlane.xlu0 %1304
    %v1306 = vmul.f32 %v1305, %v1300
    %v1307 = vadd.f32 %v1306, 1e-05
    %v1308 = vrsqrt.pop %v1307
    %v1309 = vmul.f32 %v1308, %v1307
    %v1310 = vmul.f32 %v1309, %v1308
    %v1311 = vmul.f32 0.5, %v1310
    %v1312 = vsub.f32 1.5, %v1311
    %v1313 = vmul.f32 %v1308, %v1312
    %vm1314 = vweird.f32 %v1307
    %vm1315 = vweird.f32 %v1308
    %vm1316 = vmor %vm1314, %vm1315
    %v1317 = vsel %vm1316, %v1308, %v1313
    %v1318 = vmul.f32 %v1302, %v1317
    %v1319 = vld [vmem:[#allocation12 + $0x14] sm:$0x1]
    %v1320 = vperm.slane %v1319, 0
    %v1321 = vmul.f32 %v1318, %v1320
    %v1322 = vld [vmem:[#allocation12 + $0x15] sm:$0x1]
    %v1323 = vperm.slane %v1322, 0
    %v1324 = vadd.f32 %v1321, %v1323
    %v1325 = vld [vmem:[#allocation9 + $0x68] sm:$0xff]
    %v1326 = vld [vmem:[#allocation9 + $0x70] sm:$0xff]
    %v1327 = vld [vmem:[#allocation9 + $0x78] sm:$0xff]
    %v1328 = vld [vmem:[#allocation9 + $0x80] sm:$0xff]
    %v1329 = vld [vmem:[#allocation9 + $0x88] sm:$0xff]
    %v1330 = vld [vmem:[#allocation9 + $0x90] sm:$0xff]
    %v1331 = vld [vmem:[#allocation9 + $0x98] sm:$0xff]
    %v1332 = vld [vmem:[#allocation9 + $0xa0] sm:$0xff]
    %v1333 = vld [vmem:[#allocation9 + $0xa8] sm:$0xff]
    %v1334 = vld [vmem:[#allocation9 + $0xb0] sm:$0xff]
    %v1335 = vld [vmem:[#allocation9 + $0xb8] sm:$0xff]
    %v1336 = vld [vmem:[#allocation9 + $0xc0] sm:$0xff]
    %v1337 = vld [vmem:[#allocation9 + $0xc8] sm:$0xff]
    %v1338 = vld [vmem:[#allocation9 + $0xd0] sm:$0xff]
    %v1339 = vld [vmem:[#allocation9 + $0xd8] sm:$0xff]
    %v1340 = vld [vmem:[#allocation9 + $0xe0] sm:$0xff]
    %v1341 = vld [vmem:[#allocation12 + $0x16] sm:$0x1]
    %v1342 = vperm.slane %v1341, 0
    %1343 = vmatpush.msra.mxu0 %v1340
    %1344 = vmatpush.msra.mxu0 %v1339
    %1345 = vmatpush.msra.mxu0 %v1338
    %1346 = vmatpush.msra.mxu0 %v1337
    %1347 = vmatpush.msra.mxu0 %v1336
    %1348 = vmatpush.msra.mxu0 %v1335
    %1349 = vmatpush.msra.mxu0 %v1334
    %1350 = vmatpush.msra.mxu0 %v1333
    %1351 = vmatpush.msra.mxu0 %v1332
    %1352 = vmatpush.msra.mxu0 %v1331
    %1353 = vmatpush.msra.mxu0 %v1330
    %1354 = vmatpush.msra.mxu0 %v1329
    %1355 = vmatpush.msra.mxu0 %v1328
    %1356 = vmatpush.msra.mxu0 %v1327
    %1357 = vmatpush.msra.mxu0 %v1326
    %1358 = vmatpush.msra.mxu0 %v1325
    %1359 = vmatmul.f32.gmra.mxu0 %v1324
    %v1360 = vpop.f32.mrf.mxu0
    %v1361 = vadd.f32 %v1342, %v1360
    %1362 = vdwg.mxu0
    %v1363 = vmax.f32 %v1361, 0.0
    %v1364 = vld [vmem:[#allocation12 + $0x17] sm:$0x1]
    %v1365 = vperm.slane %v1364, 0
    %v1366 = vmul.f32 %v1363, %v1365
    %1367 = vadd.xlane.f32.xlu0 %v1366
    %v1368 = vpop.xlane.xlu0 %1367
    %v1369 = vld [vmem:[#allocation12 + $0x18] sm:$0x1]
    %v1370 = vperm.slane %v1369, 0
    %v1371 = vadd.f32 %v1368, %v1370
    %1373 = vset.pattern.permute.xlu0 0
    %1374 = vperm.xlu0 %1373, %v1371
    %v1375 = vpop.permute.xlu0 %1374
    %1377 = vst [vmem:[%s7] sm:$0xff] %v1375
    // Predicated region
    $region58: #{gttp_forward.1} parent=1 // pred_check
      _
    $region59: #{gttp_forward.1} parent=1 // pred_check_branch
      %1379 = sbr.rel (0) target = $region61
    $region60: #{gttp_forward.1} parent=1 // pred_region
      _
    $region61: #{gttp_forward.1} parent=1 // pred_fallthru
      _
    // Predicated region
    $region62: #{gttp_forward.1} parent=1 // pred_check
      _
    $region63: #{gttp_forward.1} parent=1 // pred_check_branch
      %1381 = sbr.rel (0) target = $region65
    $region64: #{gttp_forward.1} parent=1 // pred_region
      _
    $region65: #{gttp_forward.1} parent=1 // pred_fallthru
      _
    %1382 = vsyncpa [#allocation3], 1
    %1383 = vsyncpa [#allocation10], 1
    %1384 = vsyncpa [#allocation13], 1
    %1385 = vsyncpa [#allocation4], 1
    %1386 = vsyncpa [#allocation7], 1

</llo_original>
